<compile_context>
chip_gen: v6e
topology: v6e:2x2x1
jax: 0.10.0
libtpu: 0.0.40
codegen_flags: <defaults>
</compile_context>

<pallas_src>
import math

import jax
import jax.numpy as jnp
from jax.experimental import pallas as pl
from jax.experimental.pallas import tpu as pltpu

# RReLU default bounds in PyTorch: lower=1/8, upper=1/3 (eval-mode fixed slope).
_RRELU_SLOPE = (1.0 / 8.0 + 1.0 / 3.0) / 2.0


def _round_up(x, m):
    return (x + m - 1) // m * m


def _net_kernel(x_ref, w1_ref, b1_ref, w2_ref, b2_ref, o_ref):
    # fc1: bf16 inputs on the MXU, f32 accumulation; bias add in f32.
    h = jnp.dot(x_ref[...], w1_ref[...], preferred_element_type=jnp.float32)
    h = h + b1_ref[...]
    # RReLU (eval mode): fixed negative slope (lower+upper)/2, computed in f32.
    h = jnp.where(h >= 0.0, h, h * _RRELU_SLOPE)
    # fc2: cast activations back to the MXU compute dtype, accumulate in f32.
    out = jnp.dot(h.astype(w2_ref.dtype), w2_ref[...],
                  preferred_element_type=jnp.float32)
    o_ref[...] = (out + b2_ref[...]).astype(o_ref.dtype)


def net_forward(x, w1, b1, w2, b2, *, block_m=None,
                compute_dtype=jnp.bfloat16):
    """Fused fc1 -> RReLU -> fc2 as a single Pallas kernel.

    x:  [B, F]   float32
    w1: [F, H1]  float32   (fc1 weight, transposed from PyTorch [out, in])
    b1: [1, H1]  float32
    w2: [H1, C]  float32   (fc2 weight, transposed)
    b2: [1, C]   float32
    returns [B, C] float32
    """
    B, F = x.shape
    H1 = w1.shape[1]
    C = w2.shape[1]

    # --- Batch tile: multiple of 8 (f32 sublane), 128 when B is large. ---
    if block_m is None:
        bm = 128 if B >= 128 else _round_up(B, 8)
    else:
        bm = block_m
    assert bm % 8 == 0, "block_m must be a multiple of 8 (f32 sublane)"

    # --- Lane-dense padding: pad every lane dim to a multiple of 128. ---
    # Zero padding is exact: padded contraction columns/rows contribute 0,
    # RReLU(0) = 0, and the padded output columns are sliced off below.
    Bp = _round_up(B, bm)
    Fp = _round_up(F, 128)
    Hp = _round_up(H1, 128)
    Cp = _round_up(C, 128)

    xp = jnp.zeros((Bp, Fp), jnp.float32).at[:B, :F].set(x).astype(compute_dtype)
    w1p = jnp.zeros((Fp, Hp), jnp.float32).at[:F, :H1].set(w1).astype(compute_dtype)
    b1p = jnp.zeros((1, Hp), jnp.float32).at[:, :H1].set(b1)
    w2p = jnp.zeros((Hp, Cp), jnp.float32).at[:H1, :C].set(w2).astype(compute_dtype)
    b2p = jnp.zeros((1, Cp), jnp.float32).at[:, :C].set(b2)

    grid = (Bp // bm,)

    flops = 2 * Bp * (Fp * Hp + Hp * Cp)
    bytes_accessed = (
        xp.size * xp.dtype.itemsize
        + w1p.size * w1p.dtype.itemsize
        + b1p.size * b1p.dtype.itemsize
        + w2p.size * w2p.dtype.itemsize
        + b2p.size * b2p.dtype.itemsize
        + Bp * Cp * 4
    )

    out_padded = pl.pallas_call(
        _net_kernel,
        out_shape=jax.ShapeDtypeStruct((Bp, Cp), jnp.float32),
        grid_spec=pltpu.PrefetchScalarGridSpec(
            num_scalar_prefetch=0,
            grid=grid,
            in_specs=[
                # x tile over the batch axis (double-buffered by default).
                pl.BlockSpec((bm, Fp), lambda i: (i, 0)),
                # Grid-invariant weights: single-buffered (constant index_map),
                # so they don't take 2x VMEM.
                pl.BlockSpec((Fp, Hp), lambda i: (0, 0),
                             pipeline_mode=pl.Buffered(buffer_count=1)),
                pl.BlockSpec((1, Hp), lambda i: (0, 0)),
                pl.BlockSpec((Hp, Cp), lambda i: (0, 0),
                             pipeline_mode=pl.Buffered(buffer_count=1)),
                pl.BlockSpec((1, Cp), lambda i: (0, 0)),
            ],
            # Lane-dense output: Cp is a multiple of 128 -> unmasked vst.
            out_specs=pl.BlockSpec((bm, Cp), lambda i: (i, 0)),
        ),
        compiler_params=pltpu.CompilerParams(
            dimension_semantics=("parallel",),
            vmem_limit_bytes=32 * 1024 * 1024,
        ),
        cost_estimate=pl.CostEstimate(
            flops=flops, transcendentals=0, bytes_accessed=bytes_accessed
        ),
    )(xp, w1p, b1p, w2p, b2p)

    # Strip the batch / class padding outside the kernel.
    return out_padded[:B, :C]


def _init_linear(key, in_features, out_features):
    """PyTorch-style Linear init: U(-1/sqrt(fan_in), 1/sqrt(fan_in)).
    Returns (weight [in, out], bias [1, out])."""
    kw, kb = jax.random.split(key)
    bound = 1.0 / math.sqrt(in_features)
    w = jax.random.uniform(
        kw, (in_features, out_features), jnp.float32, -bound, bound
    )
    b = jax.random.uniform(kb, (1, out_features), jnp.float32, -bound, bound)
    return w, b


if __name__ == "__main__":
    # Small shapes consistent with the module's forward (fc1 -> RReLU -> fc2).
    # batch=256 gives a 2-step "parallel" grid (both TCs busy on v7x).
    batch = 256
    input_size = 64
    hidden_size1 = 1000   # matches the module's hidden_size1
    num_classes = 10

    key = jax.random.PRNGKey(0)
    k_x, k_fc1, k_fc2 = jax.random.split(key, 3)

    x = jax.random.normal(k_x, (batch, input_size), jnp.float32)
    w1, b1 = _init_linear(k_fc1, input_size, hidden_size1)
    w2, b2 = _init_linear(k_fc2, hidden_size1, num_classes)

    # TODO(synk): training-mode RReLU (randomized per-element slopes) has no
    # deterministic equivalent here; eval-mode fixed-slope semantics are used.
    out = net_forward(x, w1, b1, w2, b2)
    jax.block_until_ready(out)

    # Pure-JAX f32 reference; kernel uses bf16 inputs with f32 accumulation,
    # so compare with a tolerance that covers bf16 rounding.
    ref_h = x @ w1 + b1
    ref_h = jnp.where(ref_h >= 0.0, ref_h, ref_h * _RRELU_SLOPE)
    ref = ref_h @ w2 + b2
    assert out.shape == (batch, num_classes)
    assert jnp.allclose(out, ref, atol=5e-2, rtol=5e-2), (
        float(jnp.max(jnp.abs(out - ref)))
    )

    print("KERNEL_OK")
</pallas_src>

<mosaic_0001>
module attributes {stable_mosaic.version = 11 : i64} {
  func.func @_net_kernel(%arg0: i32, %arg1: memref<128x128xbf16, #tpu.memory_space<vmem>>, %arg2: memref<128x1024xbf16, #tpu.memory_space<vmem>>, %arg3: memref<1x1024xf32, #tpu.memory_space<vmem>>, %arg4: memref<1024x128xbf16, #tpu.memory_space<vmem>>, %arg5: memref<1x128xf32, #tpu.memory_space<vmem>>, %arg6: memref<128x128xf32, #tpu.memory_space<vmem>>) attributes {dimension_semantics = [#tpu.dimension_semantics<parallel>], iteration_bounds = array<i64: 2>, scalar_prefetch = 0 : i64, scratch_operands = 0 : i64, tpu.core_type = #tpu.core_type<tc>, window_params = [{transform_indices = @transform_0, window_bounds = array<i64: 128, 128>}, {pipeline_mode = #tpu.pipeline_mode<synchronous>, transform_indices = @transform_1, window_bounds = array<i64: 128, 1024>}, {pipeline_mode = #tpu.pipeline_mode<synchronous>, transform_indices = @transform_2, window_bounds = array<i64: 1, 1024>}, {pipeline_mode = #tpu.pipeline_mode<synchronous>, transform_indices = @transform_3, window_bounds = array<i64: 1024, 128>}, {pipeline_mode = #tpu.pipeline_mode<synchronous>, transform_indices = @transform_4, window_bounds = array<i64: 1, 128>}, {transform_indices = @transform_5, window_bounds = array<i64: 128, 128>}]} {
    %c0 = arith.constant 0 : index
    %c0_0 = arith.constant 0 : index
    %0 = vector.load %arg1[%c0, %c0_0] : memref<128x128xbf16, #tpu.memory_space<vmem>>, vector<128x128xbf16>
    %c0_1 = arith.constant 0 : index
    %c0_2 = arith.constant 0 : index
    %1 = vector.load %arg2[%c0_1, %c0_2] : memref<128x1024xbf16, #tpu.memory_space<vmem>>, vector<128x1024xbf16>
    %cst = arith.constant dense<0.000000e+00> : vector<128x1024xf32>
    %2 = tpu.matmul %0, %1, %cst {dimension_numbers = #tpu.dot_dimension_numbers<[1], [0], [0], [1], [0, 0, 1, 1], [], []>} : vector<128x128xbf16>, vector<128x1024xbf16>, vector<128x1024xf32> -> vector<128x1024xf32>
    %c0_3 = arith.constant 0 : index
    %c0_4 = arith.constant 0 : index
    %3 = vector.load %arg3[%c0_3, %c0_4] : memref<1x1024xf32, #tpu.memory_space<vmem>>, vector<1x1024xf32>
    %4 = vector.broadcast %3 : vector<1x1024xf32> to vector<128x1024xf32>
    %5 = arith.addf %2, %4 : vector<128x1024xf32>
    %cst_5 = arith.constant 0.000000e+00 : f32
    %6 = vector.broadcast %cst_5 : f32 to vector<128x1024xf32>
    %7 = arith.cmpf oge, %5, %6 : vector<128x1024xf32>
    %cst_6 = arith.constant 0.229166672 : f32
    %8 = vector.broadcast %cst_6 : f32 to vector<128x1024xf32>
    %9 = arith.mulf %5, %8 : vector<128x1024xf32>
    %10 = arith.select %7, %5, %9 : vector<128x1024xi1>, vector<128x1024xf32>
    %11 = arith.truncf %10 : vector<128x1024xf32> to vector<128x1024xbf16>
    %c0_7 = arith.constant 0 : index
    %c0_8 = arith.constant 0 : index
    %12 = vector.load %arg4[%c0_7, %c0_8] : memref<1024x128xbf16, #tpu.memory_space<vmem>>, vector<1024x128xbf16>
    %cst_9 = arith.constant dense<0.000000e+00> : vector<128x128xf32>
    %13 = tpu.matmul %11, %12, %cst_9 {dimension_numbers = #tpu.dot_dimension_numbers<[1], [0], [0], [1], [0, 0, 1, 1], [], []>} : vector<128x1024xbf16>, vector<1024x128xbf16>, vector<128x128xf32> -> vector<128x128xf32>
    %c0_10 = arith.constant 0 : index
    %c0_11 = arith.constant 0 : index
    %14 = vector.load %arg5[%c0_10, %c0_11] : memref<1x128xf32, #tpu.memory_space<vmem>>, vector<1x128xf32>
    %15 = vector.broadcast %14 : vector<1x128xf32> to vector<128x128xf32>
    %16 = arith.addf %13, %15 : vector<128x128xf32>
    %c0_12 = arith.constant 0 : index
    %c0_13 = arith.constant 0 : index
    %17 = vector.load %arg6[%c0_12, %c0_13] : memref<128x128xf32, #tpu.memory_space<vmem>>, vector<128x128xf32>
    tpu.vector_store %arg6[%c0_12, %c0_13], %16 {strides = array<i32>} : memref<128x128xf32, #tpu.memory_space<vmem>>, vector<128x128xf32>,
    return
  }
  func.func @transform_0(%arg0: i32) -> (i32, i32) {
    %c0_i32 = arith.constant 0 : i32
    %c0_i32_0 = arith.constant 0 : i32
    return %arg0, %c0_i32 : i32, i32
  }
  func.func @transform_1(%arg0: i32) -> (i32, i32) {
    %c0_i32 = arith.constant 0 : i32
    %c0_i32_0 = arith.constant 0 : i32
    %c0_i32_1 = arith.constant 0 : i32
    return %c0_i32, %c0_i32_0 : i32, i32
  }
  func.func @transform_2(%arg0: i32) -> (i32, i32) {
    %c0_i32 = arith.constant 0 : i32
    %c0_i32_0 = arith.constant 0 : i32
    %c0_i32_1 = arith.constant 0 : i32
    return %c0_i32, %c0_i32_0 : i32, i32
  }
  func.func @transform_3(%arg0: i32) -> (i32, i32) {
    %c0_i32 = arith.constant 0 : i32
    %c0_i32_0 = arith.constant 0 : i32
    %c0_i32_1 = arith.constant 0 : i32
    return %c0_i32, %c0_i32_0 : i32, i32
  }
  func.func @transform_4(%arg0: i32) -> (i32, i32) {
    %c0_i32 = arith.constant 0 : i32
    %c0_i32_0 = arith.constant 0 : i32
    %c0_i32_1 = arith.constant 0 : i32
    return %c0_i32, %c0_i32_0 : i32, i32
  }
  func.func @transform_5(%arg0: i32) -> (i32, i32) {
    %c0_i32 = arith.constant 0 : i32
    %c0_i32_0 = arith.constant 0 : i32
    return %arg0, %c0_i32 : i32, i32
  }
}

</mosaic_0001>

<llo_original>
// kernel: tpu_custom_call.1
$region0: #{tpu_custom_call.1}
  #allocation0 [shape = 'u32[]', space=smem, size = 0x4, offset = 0x4, fixed_abs, tag = 'smem constant byte address 0x4 - core index']
  #allocation1 [shape = 'u32[144,128]{1,0:T(1,128)}', space=vmem, size = 0x12000, scoped, tag = 'internal scratch']
  %s0 = inlined_call_operand.hbm [shape: bf16[256,128], index: 0, kind: input, shape index: {}]
  %s1 = inlined_call_operand.hbm [shape: bf16[128,1024], index: 1, kind: input, shape index: {}]
  %s2 = inlined_call_operand.hbm [shape: f32[1,1024], index: 2, kind: input, shape index: {}]
  %s3 = inlined_call_operand.hbm [shape: bf16[1024,128], index: 3, kind: input, shape index: {}]
  %s4 = inlined_call_operand.vmem [shape: f32[1,128], index: 4, kind: input, shape index: {}]
  %s5 = inlined_call_operand.hbm [shape: f32[256,128], index: 5, kind: output, shape index: {}]
  %s6 = sld [smem:[#allocation0]]
  $region69: #{tpu_custom_call.1} parent=0
    _
  %s8 = ssub.s32 1, %s6
  %s9 = scalar_select 0, %s8, %s6
  $region1: #{tpu_custom_call.1} parent=0
    #allocation2 [shape = 'u8[65536]{0}', space=vmem, size = 0x10000, scoped, tag = 'input window, operand 0']
    #allocation3 [shape = 's32[2]{0}', space=sflag, size = 0x8, scoped, tag = 'scoped memory for tpu_custom_call.1']
    #allocation4 [shape = 's32[2]{0}', space=sflag, size = 0x8, scoped, tag = 'scoped memory for tpu_custom_call.1']
    #allocation5 [shape = 'u8[262144]{0}', space=vmem, size = 0x40000, scoped, tag = 'input window, operand 1, single buffered']
    #allocation6 [shape = 's32[1]{0}', space=sflag, size = 0x4, scoped, tag = 'scoped memory for tpu_custom_call.1']
    #allocation7 [shape = 'u8[4096]{0}', space=vmem, size = 0x1000, scoped, tag = 'input window, operand 2, single buffered']
    #allocation8 [shape = 'u8[262144]{0}', space=vmem, size = 0x40000, scoped, tag = 'input window, operand 3, single buffered']
    #allocation9 [shape = 's32[1]{0}', space=sflag, size = 0x4, scoped, tag = 'scoped memory for tpu_custom_call.1']
    #allocation10 [shape = 'u8[131072]{0}', space=vmem, size = 0x20000, scoped, tag = 'output window, operand 0']
    %10 = vsyncpa [#allocation3], 0
    %s11 = scalar_lea.sflag [#allocation3], 1
    %12 = vsyncpa %s11, 0
    %13 = vsyncpa [#allocation6], 0
    %14 = vsyncpa [#allocation9], 0
    %15 = vsyncpa [#allocation4], 0
    %s16 = scalar_lea.sflag [#allocation4], 1
    %17 = vsyncpa %s16, 0
    loop: start=0, step=1, limit=4
    $region2: #{tpu_custom_call.1} parent=1 // loop_pre_header
      _
    $region3: #{tpu_custom_call.1} parent=1 // loop_header
      %s19 = sphi 0, %s23
      %p20 = scmp.ge.s32.totalorder %s19, 4
      %s29 = sphi 0, %s31
      %s32 = sphi 0, %s29
      %s33 = sphi 0, %s32
      %s49 = sphi 0, %s33
      %s53 = sphi 0, %s53
      %s55 = sphi 0, %s53
      %s56 = sphi 0, %s55
      %s70 = sphi 0, %s56
      %s74 = sphi 0, %s74
      %s76 = sphi 0, %s74
      %s77 = sphi 0, %s76
      %s91 = sphi 0, %s77
      %s95 = sphi 0, %s95
      %s97 = sphi 0, %s95
      %s98 = sphi 0, %s97
      %s112 = sphi 0, %s98
      %s116 = sphi 0, %s116
      %s118 = sphi 0, %s116
      %s119 = sphi 0, %s118
      %s133 = sphi 0, %s119
      %s139 = sphi 0, %s141
      %s142 = sphi 0, %s139
      %s143 = sphi 0, %s142
      %s159 = sphi 0, %s143
    $region4: #{tpu_custom_call.1} parent=1 // loop_header_branch
      %22 = sbr.rel (%p20) target = $region8
    $region5: #{tpu_custom_call.1} parent=1 // loop_body
      %s24 = ssub.s32 %s19, 1
      %s25 = ssub.s32 %s19, 2
      %s26 = sadd.s32 %s19, 1
      %s27 = ssub.s32 %s19, %s26
      %p28 = scmp.eq.s32.totalorder %s27, 0
      %s30 = sadd.s32 %s29, 1
      %s31 = scalar_select %p28, %s29, %s30
      %p34 = pneg %p28
      %p35 = scmp.eq.s32.totalorder %s19, 1
      %p36 = por %p34, %p35
      %p37 = scmp.ne.s32.totalorder %s29, %s32
      %p38 = scmp.eq.s32.totalorder %s19, 0
      %p39 = por %p37, %p38
      %p40 = scmp.ne.s32.totalorder %s29, %s32
      %p41 = scmp.eq.s32.totalorder %s24, 1
      %p42 = por %p40, %p41
      %p43 = scmp.ne.s32.totalorder %s32, %s33
      %p44 = scmp.eq.s32.totalorder %s24, 0
      %p45 = por %p43, %p44
      %p46 = scmp.ne.s32.totalorder %s32, %s33
      %p47 = scmp.eq.s32.totalorder %s25, 1
      %p48 = por %p46, %p47
      %p50 = scmp.ne.s32.totalorder %s33, %s49
      %p51 = scmp.eq.s32.totalorder %s25, 0
      %p52 = por %p50, %p51
      %s54 = sadd.s32 %s53, 1
      %p57 = scmp.eq.s32.totalorder %s19, 1
      %p58 = scmp.ne.s32.totalorder %s53, %s55
      %p59 = scmp.eq.s32.totalorder %s19, 0
      %p60 = por %p58, %p59
      %p61 = scmp.ne.s32.totalorder %s53, %s55
      %p62 = scmp.eq.s32.totalorder %s24, 1
      %p63 = por %p61, %p62
      %p64 = scmp.ne.s32.totalorder %s55, %s56
      %p65 = scmp.eq.s32.totalorder %s24, 0
      %p66 = por %p64, %p65
      %p67 = scmp.ne.s32.totalorder %s55, %s56
      %p68 = scmp.eq.s32.totalorder %s25, 1
      %p69 = por %p67, %p68
      %p71 = scmp.ne.s32.totalorder %s56, %s70
      %p72 = scmp.eq.s32.totalorder %s25, 0
      %p73 = por %p71, %p72
      %s75 = sadd.s32 %s74, 1
      %p78 = scmp.eq.s32.totalorder %s19, 1
      %p79 = scmp.ne.s32.totalorder %s74, %s76
      %p80 = scmp.eq.s32.totalorder %s19, 0
      %p81 = por %p79, %p80
      %p82 = scmp.ne.s32.totalorder %s74, %s76
      %p83 = scmp.eq.s32.totalorder %s24, 1
      %p84 = por %p82, %p83
      %p85 = scmp.ne.s32.totalorder %s76, %s77
      %p86 = scmp.eq.s32.totalorder %s24, 0
      %p87 = por %p85, %p86
      %p88 = scmp.ne.s32.totalorder %s76, %s77
      %p89 = scmp.eq.s32.totalorder %s25, 1
      %p90 = por %p88, %p89
      %p92 = scmp.ne.s32.totalorder %s77, %s91
      %p93 = scmp.eq.s32.totalorder %s25, 0
      %p94 = por %p92, %p93
      %s96 = sadd.s32 %s95, 1
      %p99 = scmp.eq.s32.totalorder %s19, 1
      %p100 = scmp.ne.s32.totalorder %s95, %s97
      %p101 = scmp.eq.s32.totalorder %s19, 0
      %p102 = por %p100, %p101
      %p103 = scmp.ne.s32.totalorder %s95, %s97
      %p104 = scmp.eq.s32.totalorder %s24, 1
      %p105 = por %p103, %p104
      %p106 = scmp.ne.s32.totalorder %s97, %s98
      %p107 = scmp.eq.s32.totalorder %s24, 0
      %p108 = por %p106, %p107
      %p109 = scmp.ne.s32.totalorder %s97, %s98
      %p110 = scmp.eq.s32.totalorder %s25, 1
      %p111 = por %p109, %p110
      %p113 = scmp.ne.s32.totalorder %s98, %s112
      %p114 = scmp.eq.s32.totalorder %s25, 0
      %p115 = por %p113, %p114
      %s117 = sadd.s32 %s116, 1
      %p120 = scmp.eq.s32.totalorder %s19, 1
      %p121 = scmp.ne.s32.totalorder %s116, %s118
      %p122 = scmp.eq.s32.totalorder %s19, 0
      %p123 = por %p121, %p122
      %p124 = scmp.ne.s32.totalorder %s116, %s118
      %p125 = scmp.eq.s32.totalorder %s24, 1
      %p126 = por %p124, %p125
      %p127 = scmp.ne.s32.totalorder %s118, %s119
      %p128 = scmp.eq.s32.totalorder %s24, 0
      %p129 = por %p127, %p128
      %p130 = scmp.ne.s32.totalorder %s118, %s119
      %p131 = scmp.eq.s32.totalorder %s25, 1
      %p132 = por %p130, %p131
      %p134 = scmp.ne.s32.totalorder %s119, %s133
      %p135 = scmp.eq.s32.totalorder %s25, 0
      %p136 = por %p134, %p135
      %s137 = ssub.s32 %s19, %s26
      %p138 = scmp.eq.s32.totalorder %s137, 0
      %s140 = sadd.s32 %s139, 1
      %s141 = scalar_select %p138, %s139, %s140
      %p144 = pneg %p138
      %p145 = scmp.eq.s32.totalorder %s19, 1
      %p146 = por %p144, %p145
      %p147 = scmp.ne.s32.totalorder %s139, %s142
      %p148 = scmp.eq.s32.totalorder %s19, 0
      %p149 = por %p147, %p148
      %p150 = scmp.ne.s32.totalorder %s139, %s142
      %p151 = scmp.eq.s32.totalorder %s24, 1
      %p152 = por %p150, %p151
      %p153 = scmp.ne.s32.totalorder %s142, %s143
      %p154 = scmp.eq.s32.totalorder %s24, 0
      %p155 = por %p153, %p154
      %p156 = scmp.ne.s32.totalorder %s142, %s143
      %p157 = scmp.eq.s32.totalorder %s25, 1
      %p158 = por %p156, %p157
      %p160 = scmp.ne.s32.totalorder %s143, %s159
      %p161 = scmp.eq.s32.totalorder %s25, 0
      %p162 = por %p160, %p161
      %p163 = scmp.le.s32.totalorder 1, %s19
      %p164 = scmp.lt.s32.totalorder %s19, 3
      %p165 = pnand %p163, %p164
      %p166 = pneg %p165
      // Predicated region
      $region9: #{tpu_custom_call.1} parent=5 // pred_check
        _
      $region10: #{tpu_custom_call.1} parent=5 // pred_check_branch
        %168 = sbr.rel (%p165) target = $region12
      $region11: #{tpu_custom_call.1} parent=5 // pred_region
        %s169 = ssub.s32 %s19, 1
        // Predicated region
        $region13: #{tpu_custom_call.1} parent=11 // pred_check
          %p170 = pneg %p66
        $region14: #{tpu_custom_call.1} parent=11 // pred_check_branch
          %172 = sbr.rel (%p170) target = $region16
        $region15: #{tpu_custom_call.1} parent=11 // pred_region
          %s174 = ssub.s32 8192, 8192
          %175 = vsyncadd [#allocation6], %s174
          %s176 = sshll.u32 [#allocation5], 4
          %s177 = int_to_ptr.vmem [resolvable:$true] %s176
          %182 = dma.hbm_to_vmem [thread:$0]  %s1, 8192, %s177, [#allocation6], 512, 512, 32
        $region16: #{tpu_custom_call.1} parent=11 // pred_fallthru
          _
        // Predicated region
        $region17: #{tpu_custom_call.1} parent=11 // pred_check
          %p183 = pneg %p87
        $region18: #{tpu_custom_call.1} parent=11 // pred_check_branch
          %185 = sbr.rel (%p183) target = $region20
        $region19: #{tpu_custom_call.1} parent=11 // pred_region
          %s187 = ssub.s32 128, 128
          %188 = vsyncadd [#allocation6], %s187
          %s190 = sshll.u32 [#allocation7], 4
          %s191 = int_to_ptr.vmem [resolvable:$true] %s190
          %193 = dma.hbm_to_vmem [thread:$0]  %s2, 128, %s191, [#allocation6]
        $region20: #{tpu_custom_call.1} parent=11 // pred_fallthru
          _
        // Predicated region
        $region21: #{tpu_custom_call.1} parent=11 // pred_check
          %p194 = pneg %p108
        $region22: #{tpu_custom_call.1} parent=11 // pred_check_branch
          %196 = sbr.rel (%p194) target = $region24
        $region23: #{tpu_custom_call.1} parent=11 // pred_region
          %s198 = ssub.s32 8192, 8192
          %199 = vsyncadd [#allocation9], %s198
          %s200 = sshll.u32 [#allocation8], 4
          %s201 = int_to_ptr.vmem [resolvable:$true] %s200
          %206 = dma.hbm_to_vmem [thread:$0]  %s3, 8192, %s201, [#allocation9], 64, 64, 4
        $region24: #{tpu_custom_call.1} parent=11 // pred_fallthru
          _
        // Predicated region
        $region25: #{tpu_custom_call.1} parent=11 // pred_check
          %p207 = pneg %p129
        $region26: #{tpu_custom_call.1} parent=11 // pred_check_branch
          %209 = sbr.rel (%p207) target = $region28
        $region27: #{tpu_custom_call.1} parent=11 // pred_region
          _
        $region28: #{tpu_custom_call.1} parent=11 // pred_fallthru
          _
      $region12: #{tpu_custom_call.1} parent=5 // pred_fallthru
        _
      %p210 = scmp.lt.s32.totalorder %s19, 2
      // Predicated region
      $region29: #{tpu_custom_call.1} parent=5 // pred_check
        %p211 = pneg %p210
      $region30: #{tpu_custom_call.1} parent=5 // pred_check_branch
        %213 = sbr.rel (%p211) target = $region32
      $region31: #{tpu_custom_call.1} parent=5 // pred_region
        // Predicated region
        $region33: #{tpu_custom_call.1} parent=31 // pred_check
          %p214 = pneg %p39
        $region34: #{tpu_custom_call.1} parent=31 // pred_check_branch
          %216 = sbr.rel (%p214) target = $region36
        $region35: #{tpu_custom_call.1} parent=31 // pred_region
          %s217 = sand.u32 %s29, 1
          %s218 = scalar_lea.sflag [#allocation3], %s217
          %s219 = sand.u32 %s29, 1
          %s220 = smul.addr %s219, 64
          %s221 = scalar_lea.vmem [#allocation2], %s220
          %s222 = smul.u32 16, %s19
          %s224 = ssub.s32 1024, 1024
          %225 = vsyncadd %s218, %s224
          %s226 = smul.addr %s222, 64
          %s227 = scalar_lea.hbm %s0, %s226
          %s228 = sshll.u32 %s221, 4
          %s229 = int_to_ptr.vmem [resolvable:$true] %s228
          %234 = dma.hbm_to_vmem [thread:$0]  %s227, 1024, %s229, %s218, 64, 64, 4
        $region36: #{tpu_custom_call.1} parent=31 // pred_fallthru
          _
      $region32: #{tpu_custom_call.1} parent=5 // pred_fallthru
        _
      %p235 = scmp.le.s32.totalorder 1, %s19
      %p236 = scmp.lt.s32.totalorder %s19, 3
      %p237 = pnand %p235, %p236
      %p238 = pneg %p237
      // Predicated region
      $region37: #{tpu_custom_call.1} parent=5 // pred_check
        _
      $region38: #{tpu_custom_call.1} parent=5 // pred_check_branch
        %240 = sbr.rel (%p237) target = $region40
      $region39: #{tpu_custom_call.1} parent=5 // pred_region
        %s241 = ssub.s32 %s19, 1
        %s242 = sand.u32 %s32, 1
        %s243 = scalar_lea.sflag [#allocation3], %s242
        %s244 = sand.u32 %s32, 1
        %s245 = smul.addr %s244, 64
        %s246 = scalar_lea.vmem [#allocation2], %s245
        // Predicated region
        $region41: #{tpu_custom_call.1} parent=39 // pred_check
          %p247 = pneg %p45
        $region42: #{tpu_custom_call.1} parent=39 // pred_check_branch
          %249 = sbr.rel (%p247) target = $region44
        $region43: #{tpu_custom_call.1} parent=39 // pred_region
          %250 = dma.done %s243, 1024
        $region44: #{tpu_custom_call.1} parent=39 // pred_fallthru
          _
        // Predicated region
        $region45: #{tpu_custom_call.1} parent=39 // pred_check
          %p251 = pneg %p66
        $region46: #{tpu_custom_call.1} parent=39 // pred_check_branch
          %253 = sbr.rel (%p251) target = $region48
        $region47: #{tpu_custom_call.1} parent=39 // pred_region
          %254 = dma.done [#allocation6], 8192
        $region48: #{tpu_custom_call.1} parent=39 // pred_fallthru
          _
        // Predicated region
        $region49: #{tpu_custom_call.1} parent=39 // pred_check
          %p255 = pneg %p87
        $region50: #{tpu_custom_call.1} parent=39 // pred_check_branch
          %257 = sbr.rel (%p255) target = $region52
        $region51: #{tpu_custom_call.1} parent=39 // pred_region
          %258 = dma.done [#allocation6], 128
        $region52: #{tpu_custom_call.1} parent=39 // pred_fallthru
          _
        // Predicated region
        $region53: #{tpu_custom_call.1} parent=39 // pred_check
          %p259 = pneg %p108
        $region54: #{tpu_custom_call.1} parent=39 // pred_check_branch
          %261 = sbr.rel (%p259) target = $region56
        $region55: #{tpu_custom_call.1} parent=39 // pred_region
          %262 = dma.done [#allocation9], 8192
        $region56: #{tpu_custom_call.1} parent=39 // pred_fallthru
          _
        %s263 = sand.u32 %s32, 1
        %s264 = scalar_lea.sflag [#allocation3], %s263
        %s265 = sand.u32 %s32, 1
        %s266 = smul.addr %s265, 64
        %s267 = scalar_lea.vmem [#allocation2], %s266
        %p268 = pneg %p45
        %p269 = pneg %p42
        %p270 = pneg %p66
        %p271 = pneg %p63
        %p272 = pneg %p87
        %p273 = pneg %p84
        %p274 = pneg %p108
        %p275 = pneg %p105
        %p276 = pneg %p129
        %p277 = pneg %p126
        %p278 = pneg %p155
        %p279 = pneg %p152
        %s280 = sand.u32 %s142, 1
        %s281 = scalar_lea.sflag [#allocation4], %s280
        %s282 = sand.u32 %s142, 1
        %s283 = smul.addr %s282, 128
        %s284 = scalar_lea.vmem [#allocation10], %s283
        %s285 = smul.u32 16, %s24
        %s286 = smul.u32 16, %s24
        %v288 = vld [vmem:[%s246] sm:$0xf]
        %v289 = vld [vmem:[%s246 + $0x4] sm:$0xf]
        %v290 = vld [vmem:[%s246 + $0x8] sm:$0xf]
        %v291 = vld [vmem:[%s246 + $0xc] sm:$0xf]
        %v292 = vld [vmem:[%s246 + $0x10] sm:$0xf]
        %v293 = vld [vmem:[%s246 + $0x14] sm:$0xf]
        %v294 = vld [vmem:[%s246 + $0x18] sm:$0xf]
        %v295 = vld [vmem:[%s246 + $0x1c] sm:$0xf]
        %v296 = vld [vmem:[%s246 + $0x20] sm:$0xf]
        %v297 = vld [vmem:[%s246 + $0x24] sm:$0xf]
        %v298 = vld [vmem:[%s246 + $0x28] sm:$0xf]
        %v299 = vld [vmem:[%s246 + $0x2c] sm:$0xf]
        %v300 = vld [vmem:[%s246 + $0x30] sm:$0xf]
        %v301 = vld [vmem:[%s246 + $0x34] sm:$0xf]
        %v302 = vld [vmem:[%s246 + $0x38] sm:$0xf]
        %v303 = vld [vmem:[%s246 + $0x3c] sm:$0xf]
        %v304 = vld [vmem:[#allocation5] sm:$0xff]
        %v305 = vld [vmem:[#allocation5 + $0x8] sm:$0xff]
        %v306 = vld [vmem:[#allocation5 + $0x10] sm:$0xff]
        %v307 = vld [vmem:[#allocation5 + $0x18] sm:$0xff]
        %v308 = vld [vmem:[#allocation5 + $0x20] sm:$0xff]
        %v309 = vld [vmem:[#allocation5 + $0x28] sm:$0xff]
        %v310 = vld [vmem:[#allocation5 + $0x30] sm:$0xff]
        %v311 = vld [vmem:[#allocation5 + $0x38] sm:$0xff]
        %v312 = vld [vmem:[#allocation5 + $0x40] sm:$0xff]
        %v313 = vld [vmem:[#allocation5 + $0x48] sm:$0xff]
        %v314 = vld [vmem:[#allocation5 + $0x50] sm:$0xff]
        %v315 = vld [vmem:[#allocation5 + $0x58] sm:$0xff]
        %v316 = vld [vmem:[#allocation5 + $0x60] sm:$0xff]
        %v317 = vld [vmem:[#allocation5 + $0x68] sm:$0xff]
        %v318 = vld [vmem:[#allocation5 + $0x70] sm:$0xff]
        %v319 = vld [vmem:[#allocation5 + $0x78] sm:$0xff]
        %v320 = vld [vmem:[#allocation5 + $0x80] sm:$0xff]
        %v321 = vld [vmem:[#allocation5 + $0x88] sm:$0xff]
        %v322 = vld [vmem:[#allocation5 + $0x90] sm:$0xff]
        %v323 = vld [vmem:[#allocation5 + $0x98] sm:$0xff]
        %v324 = vld [vmem:[#allocation5 + $0xa0] sm:$0xff]
        %v325 = vld [vmem:[#allocation5 + $0xa8] sm:$0xff]
        %v326 = vld [vmem:[#allocation5 + $0xb0] sm:$0xff]
        %v327 = vld [vmem:[#allocation5 + $0xb8] sm:$0xff]
        %v328 = vld [vmem:[#allocation5 + $0xc0] sm:$0xff]
        %v329 = vld [vmem:[#allocation5 + $0xc8] sm:$0xff]
        %v330 = vld [vmem:[#allocation5 + $0xd0] sm:$0xff]
        %v331 = vld [vmem:[#allocation5 + $0xd8] sm:$0xff]
        %v332 = vld [vmem:[#allocation5 + $0xe0] sm:$0xff]
        %v333 = vld [vmem:[#allocation5 + $0xe8] sm:$0xff]
        %v334 = vld [vmem:[#allocation5 + $0xf0] sm:$0xff]
        %v335 = vld [vmem:[#allocation5 + $0xf8] sm:$0xff]
        %v336 = vld [vmem:[#allocation5 + $0x100] sm:$0xff]
        %v337 = vld [vmem:[#allocation5 + $0x108] sm:$0xff]
        %v338 = vld [vmem:[#allocation5 + $0x110] sm:$0xff]
        %v339 = vld [vmem:[#allocation5 + $0x118] sm:$0xff]
        %v340 = vld [vmem:[#allocation5 + $0x120] sm:$0xff]
        %v341 = vld [vmem:[#allocation5 + $0x128] sm:$0xff]
        %v342 = vld [vmem:[#allocation5 + $0x130] sm:$0xff]
        %v343 = vld [vmem:[#allocation5 + $0x138] sm:$0xff]
        %v344 = vld [vmem:[#allocation5 + $0x140] sm:$0xff]
        %v345 = vld [vmem:[#allocation5 + $0x148] sm:$0xff]
        %v346 = vld [vmem:[#allocation5 + $0x150] sm:$0xff]
        %v347 = vld [vmem:[#allocation5 + $0x158] sm:$0xff]
        %v348 = vld [vmem:[#allocation5 + $0x160] sm:$0xff]
        %v349 = vld [vmem:[#allocation5 + $0x168] sm:$0xff]
        %v350 = vld [vmem:[#allocation5 + $0x170] sm:$0xff]
        %v351 = vld [vmem:[#allocation5 + $0x178] sm:$0xff]
        %v352 = vld [vmem:[#allocation5 + $0x180] sm:$0xff]
        %v353 = vld [vmem:[#allocation5 + $0x188] sm:$0xff]
        %v354 = vld [vmem:[#allocation5 + $0x190] sm:$0xff]
        %v355 = vld [vmem:[#allocation5 + $0x198] sm:$0xff]
        %v356 = vld [vmem:[#allocation5 + $0x1a0] sm:$0xff]
        %v357 = vld [vmem:[#allocation5 + $0x1a8] sm:$0xff]
        %v358 = vld [vmem:[#allocation5 + $0x1b0] sm:$0xff]
        %v359 = vld [vmem:[#allocation5 + $0x1b8] sm:$0xff]
        %v360 = vld [vmem:[#allocation5 + $0x1c0] sm:$0xff]
        %v361 = vld [vmem:[#allocation5 + $0x1c8] sm:$0xff]
        %v362 = vld [vmem:[#allocation5 + $0x1d0] sm:$0xff]
        %v363 = vld [vmem:[#allocation5 + $0x1d8] sm:$0xff]
        %v364 = vld [vmem:[#allocation5 + $0x1e0] sm:$0xff]
        %v365 = vld [vmem:[#allocation5 + $0x1e8] sm:$0xff]
        %v366 = vld [vmem:[#allocation5 + $0x1f0] sm:$0xff]
        %v367 = vld [vmem:[#allocation5 + $0x1f8] sm:$0xff]
        %v368 = vld [vmem:[#allocation7] sm:$0xff]
        %v370 = vlaneseq
        %v371 = vshrl.u32 %v370, 7
        %v372 = vsub.s32 0, %v371
        %v373 = vrot.slane %v368, %v372
        %v374 = vlaneseq
        %v375 = vshrl.u32 %v374, 7
        %v376 = vsub.s32 1, %v375
        %v377 = vrot.slane %v368, %v376
        %v378 = vlaneseq
        %v379 = vshrl.u32 %v378, 7
        %v380 = vsub.s32 2, %v379
        %v381 = vrot.slane %v368, %v380
        %v382 = vlaneseq
        %v383 = vshrl.u32 %v382, 7
        %v384 = vsub.s32 3, %v383
        %v385 = vrot.slane %v368, %v384
        %v386 = vlaneseq
        %v387 = vshrl.u32 %v386, 7
        %v388 = vsub.s32 4, %v387
        %v389 = vrot.slane %v368, %v388
        %v390 = vlaneseq
        %v391 = vshrl.u32 %v390, 7
        %v392 = vsub.s32 5, %v391
        %v393 = vrot.slane %v368, %v392
        %v394 = vlaneseq
        %v395 = vshrl.u32 %v394, 7
        %v396 = vsub.s32 6, %v395
        %v397 = vrot.slane %v368, %v396
        %v398 = vlaneseq
        %v399 = vshrl.u32 %v398, 7
        %v400 = vsub.s32 7, %v399
        %v401 = vrot.slane %v368, %v400
        %v426 = vunpack.c.l.b16 %v288
        %v427 = vunpack.c.l.b16 %v289
        %v428 = vunpack.c.l.b16 %v290
        %v429 = vunpack.c.l.b16 %v291
        %v430 = vunpack.c.l.b16 %v292
        %v431 = vunpack.c.l.b16 %v293
        %v432 = vunpack.c.l.b16 %v294
        %v433 = vunpack.c.l.b16 %v295
        %v434 = vunpack.c.l.b16 %v296
        %v435 = vunpack.c.l.b16 %v297
        %v436 = vunpack.c.l.b16 %v298
        %v437 = vunpack.c.l.b16 %v299
        %v438 = vunpack.c.l.b16 %v300
        %v439 = vunpack.c.l.b16 %v301
        %v440 = vunpack.c.l.b16 %v302
        %v441 = vunpack.c.l.b16 %v303
        %v442 = vpack.c.b16 %v427, %v426
        %v443 = vpack.c.b16 %v429, %v428
        %v444 = vpack.c.b16 %v431, %v430
        %v445 = vpack.c.b16 %v433, %v432
        %v446 = vpack.c.b16 %v435, %v434
        %v447 = vpack.c.b16 %v437, %v436
        %v448 = vpack.c.b16 %v439, %v438
        %v449 = vpack.c.b16 %v441, %v440
        %v522 = vunpack.c.l.b16 %v304
        %v523 = vunpack.c.h.b16 %v304
        %v524 = vunpack.c.l.b16 %v305
        %v525 = vunpack.c.h.b16 %v305
        %v526 = vunpack.c.l.b16 %v306
        %v527 = vunpack.c.h.b16 %v306
        %v528 = vunpack.c.l.b16 %v307
        %v529 = vunpack.c.h.b16 %v307
        %v530 = vunpack.c.l.b16 %v308
        %v531 = vunpack.c.h.b16 %v308
        %v532 = vunpack.c.l.b16 %v309
        %v533 = vunpack.c.h.b16 %v309
        %v534 = vunpack.c.l.b16 %v310
        %v535 = vunpack.c.h.b16 %v310
        %v536 = vunpack.c.l.b16 %v311
        %v537 = vunpack.c.h.b16 %v311
        %v538 = vunpack.c.l.b16 %v312
        %v539 = vunpack.c.h.b16 %v312
        %v540 = vunpack.c.l.b16 %v313
        %v541 = vunpack.c.h.b16 %v313
        %v542 = vunpack.c.l.b16 %v314
        %v543 = vunpack.c.h.b16 %v314
        %v544 = vunpack.c.l.b16 %v315
        %v545 = vunpack.c.h.b16 %v315
        %v546 = vunpack.c.l.b16 %v316
        %v547 = vunpack.c.h.b16 %v316
        %v548 = vunpack.c.l.b16 %v317
        %v549 = vunpack.c.h.b16 %v317
        %v550 = vunpack.c.l.b16 %v318
        %v551 = vunpack.c.h.b16 %v318
        %v552 = vunpack.c.l.b16 %v319
        %v553 = vunpack.c.h.b16 %v319
        %v554 = vunpack.c.l.b16 %v320
        %v555 = vunpack.c.h.b16 %v320
        %v556 = vunpack.c.l.b16 %v321
        %v557 = vunpack.c.h.b16 %v321
        %v558 = vunpack.c.l.b16 %v322
        %v559 = vunpack.c.h.b16 %v322
        %v560 = vunpack.c.l.b16 %v323
        %v561 = vunpack.c.h.b16 %v323
        %v562 = vunpack.c.l.b16 %v324
        %v563 = vunpack.c.h.b16 %v324
        %v564 = vunpack.c.l.b16 %v325
        %v565 = vunpack.c.h.b16 %v325
        %v566 = vunpack.c.l.b16 %v326
        %v567 = vunpack.c.h.b16 %v326
        %v568 = vunpack.c.l.b16 %v327
        %v569 = vunpack.c.h.b16 %v327
        %v570 = vunpack.c.l.b16 %v328
        %v571 = vunpack.c.h.b16 %v328
        %v572 = vunpack.c.l.b16 %v329
        %v573 = vunpack.c.h.b16 %v329
        %v574 = vunpack.c.l.b16 %v330
        %v575 = vunpack.c.h.b16 %v330
        %v576 = vunpack.c.l.b16 %v331
        %v577 = vunpack.c.h.b16 %v331
        %v578 = vunpack.c.l.b16 %v332
        %v579 = vunpack.c.h.b16 %v332
        %v580 = vunpack.c.l.b16 %v333
        %v581 = vunpack.c.h.b16 %v333
        %v582 = vunpack.c.l.b16 %v334
        %v583 = vunpack.c.h.b16 %v334
        %v584 = vunpack.c.l.b16 %v335
        %v585 = vunpack.c.h.b16 %v335
        %v586 = vunpack.c.l.b16 %v336
        %v587 = vunpack.c.h.b16 %v336
        %v588 = vunpack.c.l.b16 %v337
        %v589 = vunpack.c.h.b16 %v337
        %v590 = vunpack.c.l.b16 %v338
        %v591 = vunpack.c.h.b16 %v338
        %v592 = vunpack.c.l.b16 %v339
        %v593 = vunpack.c.h.b16 %v339
        %v594 = vunpack.c.l.b16 %v340
        %v595 = vunpack.c.h.b16 %v340
        %v596 = vunpack.c.l.b16 %v341
        %v597 = vunpack.c.h.b16 %v341
        %v598 = vunpack.c.l.b16 %v342
        %v599 = vunpack.c.h.b16 %v342
        %v600 = vunpack.c.l.b16 %v343
        %v601 = vunpack.c.h.b16 %v343
        %v602 = vunpack.c.l.b16 %v344
        %v603 = vunpack.c.h.b16 %v344
        %v604 = vunpack.c.l.b16 %v345
        %v605 = vunpack.c.h.b16 %v345
        %v606 = vunpack.c.l.b16 %v346
        %v607 = vunpack.c.h.b16 %v346
        %v608 = vunpack.c.l.b16 %v347
        %v609 = vunpack.c.h.b16 %v347
        %v610 = vunpack.c.l.b16 %v348
        %v611 = vunpack.c.h.b16 %v348
        %v612 = vunpack.c.l.b16 %v349
        %v613 = vunpack.c.h.b16 %v349
        %v614 = vunpack.c.l.b16 %v350
        %v615 = vunpack.c.h.b16 %v350
        %v616 = vunpack.c.l.b16 %v351
        %v617 = vunpack.c.h.b16 %v351
        %v618 = vunpack.c.l.b16 %v352
        %v619 = vunpack.c.h.b16 %v352
        %v620 = vunpack.c.l.b16 %v353
        %v621 = vunpack.c.h.b16 %v353
        %v622 = vunpack.c.l.b16 %v354
        %v623 = vunpack.c.h.b16 %v354
        %v624 = vunpack.c.l.b16 %v355
        %v625 = vunpack.c.h.b16 %v355
        %v626 = vunpack.c.l.b16 %v356
        %v627 = vunpack.c.h.b16 %v356
        %v628 = vunpack.c.l.b16 %v357
        %v629 = vunpack.c.h.b16 %v357
        %v630 = vunpack.c.l.b16 %v358
        %v631 = vunpack.c.h.b16 %v358
        %v632 = vunpack.c.l.b16 %v359
        %v633 = vunpack.c.h.b16 %v359
        %v634 = vunpack.c.l.b16 %v360
        %v635 = vunpack.c.h.b16 %v360
        %v636 = vunpack.c.l.b16 %v361
        %v637 = vunpack.c.h.b16 %v361
        %v638 = vunpack.c.l.b16 %v362
        %v639 = vunpack.c.h.b16 %v362
        %v640 = vunpack.c.l.b16 %v363
        %v641 = vunpack.c.h.b16 %v363
        %v642 = vunpack.c.l.b16 %v364
        %v643 = vunpack.c.h.b16 %v364
        %v644 = vunpack.c.l.b16 %v365
        %v645 = vunpack.c.h.b16 %v365
        %v646 = vunpack.c.l.b16 %v366
        %v647 = vunpack.c.h.b16 %v366
        %v648 = vunpack.c.l.b16 %v367
        %v649 = vunpack.c.h.b16 %v367
        %v650 = vpack.c.b16 %v530, %v522
        %v651 = vpack.c.b16 %v531, %v523
        %v652 = vpack.c.b16 %v532, %v524
        %v653 = vpack.c.b16 %v533, %v525
        %v654 = vpack.c.b16 %v534, %v526
        %v655 = vpack.c.b16 %v535, %v527
        %v656 = vpack.c.b16 %v536, %v528
        %v657 = vpack.c.b16 %v537, %v529
        %v658 = vpack.c.b16 %v546, %v538
        %v659 = vpack.c.b16 %v547, %v539
        %v660 = vpack.c.b16 %v548, %v540
        %v661 = vpack.c.b16 %v549, %v541
        %v662 = vpack.c.b16 %v550, %v542
        %v663 = vpack.c.b16 %v551, %v543
        %v664 = vpack.c.b16 %v552, %v544
        %v665 = vpack.c.b16 %v553, %v545
        %v666 = vpack.c.b16 %v562, %v554
        %v667 = vpack.c.b16 %v563, %v555
        %v668 = vpack.c.b16 %v564, %v556
        %v669 = vpack.c.b16 %v565, %v557
        %v670 = vpack.c.b16 %v566, %v558
        %v671 = vpack.c.b16 %v567, %v559
        %v672 = vpack.c.b16 %v568, %v560
        %v673 = vpack.c.b16 %v569, %v561
        %v674 = vpack.c.b16 %v578, %v570
        %v675 = vpack.c.b16 %v579, %v571
        %v676 = vpack.c.b16 %v580, %v572
        %v677 = vpack.c.b16 %v581, %v573
        %v678 = vpack.c.b16 %v582, %v574
        %v679 = vpack.c.b16 %v583, %v575
        %v680 = vpack.c.b16 %v584, %v576
        %v681 = vpack.c.b16 %v585, %v577
        %v682 = vpack.c.b16 %v594, %v586
        %v683 = vpack.c.b16 %v595, %v587
        %v684 = vpack.c.b16 %v596, %v588
        %v685 = vpack.c.b16 %v597, %v589
        %v686 = vpack.c.b16 %v598, %v590
        %v687 = vpack.c.b16 %v599, %v591
        %v688 = vpack.c.b16 %v600, %v592
        %v689 = vpack.c.b16 %v601, %v593
        %v690 = vpack.c.b16 %v610, %v602
        %v691 = vpack.c.b16 %v611, %v603
        %v692 = vpack.c.b16 %v612, %v604
        %v693 = vpack.c.b16 %v613, %v605
        %v694 = vpack.c.b16 %v614, %v606
        %v695 = vpack.c.b16 %v615, %v607
        %v696 = vpack.c.b16 %v616, %v608
        %v697 = vpack.c.b16 %v617, %v609
        %v698 = vpack.c.b16 %v626, %v618
        %v699 = vpack.c.b16 %v627, %v619
        %v700 = vpack.c.b16 %v628, %v620
        %v701 = vpack.c.b16 %v629, %v621
        %v702 = vpack.c.b16 %v630, %v622
        %v703 = vpack.c.b16 %v631, %v623
        %v704 = vpack.c.b16 %v632, %v624
        %v705 = vpack.c.b16 %v633, %v625
        %v706 = vpack.c.b16 %v642, %v634
        %v707 = vpack.c.b16 %v643, %v635
        %v708 = vpack.c.b16 %v644, %v636
        %v709 = vpack.c.b16 %v645, %v637
        %v710 = vpack.c.b16 %v646, %v638
        %v711 = vpack.c.b16 %v647, %v639
        %v712 = vpack.c.b16 %v648, %v640
        %v713 = vpack.c.b16 %v649, %v641
        %778 = vmatprep.subr.bf16.mxu0 %v707
        %779 = vmatpush1.bf16.msra.mxu0 %v706
        %780 = vmatprep.subr.bf16.mxu0 %v699
        %781 = vmatpush1.bf16.msra.mxu0 %v698
        %782 = vmatprep.subr.bf16.mxu0 %v691
        %783 = vmatpush1.bf16.msra.mxu0 %v690
        %784 = vmatprep.subr.bf16.mxu0 %v683
        %785 = vmatpush1.bf16.msra.mxu0 %v682
        %786 = vmatprep.subr.bf16.mxu0 %v675
        %787 = vmatpush1.bf16.msra.mxu0 %v674
        %788 = vmatprep.subr.bf16.mxu0 %v667
        %789 = vmatpush1.bf16.msra.mxu0 %v666
        %790 = vmatprep.subr.bf16.mxu0 %v659
        %791 = vmatpush1.bf16.msra.mxu0 %v658
        %792 = vmatprep.subr.bf16.mxu0 %v651
        %793 = vmatpush1.bf16.msra.mxu0 %v650
        %794 = vmatprep.subr.bf16.mxu0 0
        %795 = vmatpush2.bf16.msra.mxu0 0
        %796 = vmatprep.subr.bf16.mxu0 0
        %797 = vmatpush2.bf16.msra.mxu0 0
        %798 = vmatprep.subr.bf16.mxu0 0
        %799 = vmatpush2.bf16.msra.mxu0 0
        %800 = vmatprep.subr.bf16.mxu0 0
        %801 = vmatpush2.bf16.msra.mxu0 0
        %802 = vmatprep.subr.bf16.mxu0 0
        %803 = vmatpush2.bf16.msra.mxu0 0
        %804 = vmatprep.subr.bf16.mxu0 0
        %805 = vmatpush2.bf16.msra.mxu0 0
        %806 = vmatprep.subr.bf16.mxu0 0
        %807 = vmatpush2.bf16.msra.mxu0 0
        %808 = vmatprep.subr.bf16.mxu0 0
        %809 = vmatpush2.bf16.msra.mxu0 0
        %810 = vmatprep.mubr.bf16.mxu0 0
        %811 = vmatmul.mubr.bf16.gmra.mxu0 %v442
        %v812 = vpop.f32.mrf.mxu0
        %v813 = vadd.f32 %v373, %v812
        %v814 = vpop.f32.mrf.mxu0
        %v815 = vadd.f32 %v377, %v814
        %v816 = vpop.f32.mrf.mxu0
        %v817 = vadd.f32 %v373, %v816
        %v818 = vpop.f32.mrf.mxu0
        %v819 = vadd.f32 %v377, %v818
        %820 = vmatprep.mubr.bf16.mxu0 0
        %821 = vmatmul.mubr.bf16.gmra.mxu0 %v443
        %v822 = vpop.f32.mrf.mxu0
        %v823 = vadd.f32 %v373, %v822
        %v824 = vpop.f32.mrf.mxu0
        %v825 = vadd.f32 %v377, %v824
        %v826 = vpop.f32.mrf.mxu0
        %v827 = vadd.f32 %v373, %v826
        %v828 = vpop.f32.mrf.mxu0
        %v829 = vadd.f32 %v377, %v828
        %830 = vmatprep.mubr.bf16.mxu0 0
        %831 = vmatmul.mubr.bf16.gmra.mxu0 %v444
        %v832 = vpop.f32.mrf.mxu0
        %v833 = vadd.f32 %v373, %v832
        %v834 = vpop.f32.mrf.mxu0
        %v835 = vadd.f32 %v377, %v834
        %v836 = vpop.f32.mrf.mxu0
        %v837 = vadd.f32 %v373, %v836
        %v838 = vpop.f32.mrf.mxu0
        %v839 = vadd.f32 %v377, %v838
        %840 = vmatprep.mubr.bf16.mxu0 0
        %841 = vmatmul.mubr.bf16.gmra.mxu0 %v445
        %v842 = vpop.f32.mrf.mxu0
        %v843 = vadd.f32 %v373, %v842
        %v844 = vpop.f32.mrf.mxu0
        %v845 = vadd.f32 %v377, %v844
        %v846 = vpop.f32.mrf.mxu0
        %v847 = vadd.f32 %v373, %v846
        %v848 = vpop.f32.mrf.mxu0
        %v849 = vadd.f32 %v377, %v848
        %850 = vmatprep.mubr.bf16.mxu0 0
        %851 = vmatmul.mubr.bf16.gmra.mxu0 %v446
        %v852 = vpop.f32.mrf.mxu0
        %v853 = vadd.f32 %v373, %v852
        %v854 = vpop.f32.mrf.mxu0
        %v855 = vadd.f32 %v377, %v854
        %v856 = vpop.f32.mrf.mxu0
        %v857 = vadd.f32 %v373, %v856
        %v858 = vpop.f32.mrf.mxu0
        %v859 = vadd.f32 %v377, %v858
        %860 = vmatprep.mubr.bf16.mxu0 0
        %861 = vmatmul.mubr.bf16.gmra.mxu0 %v447
        %v862 = vpop.f32.mrf.mxu0
        %v863 = vadd.f32 %v373, %v862
        %v864 = vpop.f32.mrf.mxu0
        %v865 = vadd.f32 %v377, %v864
        %v866 = vpop.f32.mrf.mxu0
        %v867 = vadd.f32 %v373, %v866
        %v868 = vpop.f32.mrf.mxu0
        %v869 = vadd.f32 %v377, %v868
        %870 = vmatprep.mubr.bf16.mxu0 0
        %871 = vmatmul.mubr.bf16.gmra.mxu0 %v448
        %v872 = vpop.f32.mrf.mxu0
        %v873 = vadd.f32 %v373, %v872
        %v874 = vpop.f32.mrf.mxu0
        %v875 = vadd.f32 %v377, %v874
        %v876 = vpop.f32.mrf.mxu0
        %v877 = vadd.f32 %v373, %v876
        %v878 = vpop.f32.mrf.mxu0
        %v879 = vadd.f32 %v377, %v878
        %880 = vmatprep.mubr.bf16.mxu0 0
        %881 = vmatmul.mubr.bf16.gmra.mxu0 %v449
        %v882 = vpop.f32.mrf.mxu0
        %v883 = vadd.f32 %v373, %v882
        %v884 = vpop.f32.mrf.mxu0
        %v885 = vadd.f32 %v377, %v884
        %v886 = vpop.f32.mrf.mxu0
        %v887 = vadd.f32 %v373, %v886
        %v888 = vpop.f32.mrf.mxu0
        %v889 = vadd.f32 %v377, %v888
        %890 = vdwg.mxu0
        %891 = vmatprep.subr.bf16.mxu0 %v709
        %892 = vmatpush1.bf16.msra.mxu0 %v708
        %893 = vmatprep.subr.bf16.mxu0 %v701
        %894 = vmatpush1.bf16.msra.mxu0 %v700
        %895 = vmatprep.subr.bf16.mxu0 %v693
        %896 = vmatpush1.bf16.msra.mxu0 %v692
        %897 = vmatprep.subr.bf16.mxu0 %v685
        %898 = vmatpush1.bf16.msra.mxu0 %v684
        %899 = vmatprep.subr.bf16.mxu0 %v677
        %900 = vmatpush1.bf16.msra.mxu0 %v676
        %901 = vmatprep.subr.bf16.mxu0 %v669
        %902 = vmatpush1.bf16.msra.mxu0 %v668
        %903 = vmatprep.subr.bf16.mxu0 %v661
        %904 = vmatpush1.bf16.msra.mxu0 %v660
        %905 = vmatprep.subr.bf16.mxu0 %v653
        %906 = vmatpush1.bf16.msra.mxu0 %v652
        %907 = vmatprep.subr.bf16.mxu0 0
        %908 = vmatpush2.bf16.msra.mxu0 0
        %909 = vmatprep.subr.bf16.mxu0 0
        %910 = vmatpush2.bf16.msra.mxu0 0
        %911 = vmatprep.subr.bf16.mxu0 0
        %912 = vmatpush2.bf16.msra.mxu0 0
        %913 = vmatprep.subr.bf16.mxu0 0
        %914 = vmatpush2.bf16.msra.mxu0 0
        %915 = vmatprep.subr.bf16.mxu0 0
        %916 = vmatpush2.bf16.msra.mxu0 0
        %917 = vmatprep.subr.bf16.mxu0 0
        %918 = vmatpush2.bf16.msra.mxu0 0
        %919 = vmatprep.subr.bf16.mxu0 0
        %920 = vmatpush2.bf16.msra.mxu0 0
        %921 = vmatprep.subr.bf16.mxu0 0
        %922 = vmatpush2.bf16.msra.mxu0 0
        %923 = vmatprep.mubr.bf16.mxu0 0
        %924 = vmatmul.mubr.bf16.gmra.mxu0 %v442
        %v925 = vpop.f32.mrf.mxu0
        %v926 = vadd.f32 %v381, %v925
        %v927 = vpop.f32.mrf.mxu0
        %v928 = vadd.f32 %v385, %v927
        %v929 = vpop.f32.mrf.mxu0
        %v930 = vadd.f32 %v381, %v929
        %v931 = vpop.f32.mrf.mxu0
        %v932 = vadd.f32 %v385, %v931
        %933 = vmatprep.mubr.bf16.mxu0 0
        %934 = vmatmul.mubr.bf16.gmra.mxu0 %v443
        %v935 = vpop.f32.mrf.mxu0
        %v936 = vadd.f32 %v381, %v935
        %v937 = vpop.f32.mrf.mxu0
        %v938 = vadd.f32 %v385, %v937
        %v939 = vpop.f32.mrf.mxu0
        %v940 = vadd.f32 %v381, %v939
        %v941 = vpop.f32.mrf.mxu0
        %v942 = vadd.f32 %v385, %v941
        %943 = vmatprep.mubr.bf16.mxu0 0
        %944 = vmatmul.mubr.bf16.gmra.mxu0 %v444
        %v945 = vpop.f32.mrf.mxu0
        %v946 = vadd.f32 %v381, %v945
        %v947 = vpop.f32.mrf.mxu0
        %v948 = vadd.f32 %v385, %v947
        %v949 = vpop.f32.mrf.mxu0
        %v950 = vadd.f32 %v381, %v949
        %v951 = vpop.f32.mrf.mxu0
        %v952 = vadd.f32 %v385, %v951
        %953 = vmatprep.mubr.bf16.mxu0 0
        %954 = vmatmul.mubr.bf16.gmra.mxu0 %v445
        %v955 = vpop.f32.mrf.mxu0
        %v956 = vadd.f32 %v381, %v955
        %v957 = vpop.f32.mrf.mxu0
        %v958 = vadd.f32 %v385, %v957
        %v959 = vpop.f32.mrf.mxu0
        %v960 = vadd.f32 %v381, %v959
        %v961 = vpop.f32.mrf.mxu0
        %v962 = vadd.f32 %v385, %v961
        %963 = vmatprep.mubr.bf16.mxu0 0
        %964 = vmatmul.mubr.bf16.gmra.mxu0 %v446
        %v965 = vpop.f32.mrf.mxu0
        %v966 = vadd.f32 %v381, %v965
        %v967 = vpop.f32.mrf.mxu0
        %v968 = vadd.f32 %v385, %v967
        %v969 = vpop.f32.mrf.mxu0
        %v970 = vadd.f32 %v381, %v969
        %v971 = vpop.f32.mrf.mxu0
        %v972 = vadd.f32 %v385, %v971
        %973 = vmatprep.mubr.bf16.mxu0 0
        %974 = vmatmul.mubr.bf16.gmra.mxu0 %v447
        %v975 = vpop.f32.mrf.mxu0
        %v976 = vadd.f32 %v381, %v975
        %v977 = vpop.f32.mrf.mxu0
        %v978 = vadd.f32 %v385, %v977
        %v979 = vpop.f32.mrf.mxu0
        %v980 = vadd.f32 %v381, %v979
        %v981 = vpop.f32.mrf.mxu0
        %v982 = vadd.f32 %v385, %v981
        %983 = vmatprep.mubr.bf16.mxu0 0
        %984 = vmatmul.mubr.bf16.gmra.mxu0 %v448
        %v985 = vpop.f32.mrf.mxu0
        %v986 = vadd.f32 %v381, %v985
        %v987 = vpop.f32.mrf.mxu0
        %v988 = vadd.f32 %v385, %v987
        %v989 = vpop.f32.mrf.mxu0
        %v990 = vadd.f32 %v381, %v989
        %v991 = vpop.f32.mrf.mxu0
        %v992 = vadd.f32 %v385, %v991
        %993 = vmatprep.mubr.bf16.mxu0 0
        %994 = vmatmul.mubr.bf16.gmra.mxu0 %v449
        %v995 = vpop.f32.mrf.mxu0
        %v996 = vadd.f32 %v381, %v995
        %v997 = vpop.f32.mrf.mxu0
        %v998 = vadd.f32 %v385, %v997
        %v999 = vpop.f32.mrf.mxu0
        %v1000 = vadd.f32 %v381, %v999
        %v1001 = vpop.f32.mrf.mxu0
        %v1002 = vadd.f32 %v385, %v1001
        %1003 = vdwg.mxu0
        %1004 = vmatprep.subr.bf16.mxu0 %v711
        %1005 = vmatpush1.bf16.msra.mxu0 %v710
        %1006 = vmatprep.subr.bf16.mxu0 %v703
        %1007 = vmatpush1.bf16.msra.mxu0 %v702
        %1008 = vmatprep.subr.bf16.mxu0 %v695
        %1009 = vmatpush1.bf16.msra.mxu0 %v694
        %1010 = vmatprep.subr.bf16.mxu0 %v687
        %1011 = vmatpush1.bf16.msra.mxu0 %v686
        %1012 = vmatprep.subr.bf16.mxu0 %v679
        %1013 = vmatpush1.bf16.msra.mxu0 %v678
        %1014 = vmatprep.subr.bf16.mxu0 %v671
        %1015 = vmatpush1.bf16.msra.mxu0 %v670
        %1016 = vmatprep.subr.bf16.mxu0 %v663
        %1017 = vmatpush1.bf16.msra.mxu0 %v662
        %1018 = vmatprep.subr.bf16.mxu0 %v655
        %1019 = vmatpush1.bf16.msra.mxu0 %v654
        %1020 = vmatprep.subr.bf16.mxu0 0
        %1021 = vmatpush2.bf16.msra.mxu0 0
        %1022 = vmatprep.subr.bf16.mxu0 0
        %1023 = vmatpush2.bf16.msra.mxu0 0
        %1024 = vmatprep.subr.bf16.mxu0 0
        %1025 = vmatpush2.bf16.msra.mxu0 0
        %1026 = vmatprep.subr.bf16.mxu0 0
        %1027 = vmatpush2.bf16.msra.mxu0 0
        %1028 = vmatprep.subr.bf16.mxu0 0
        %1029 = vmatpush2.bf16.msra.mxu0 0
        %1030 = vmatprep.subr.bf16.mxu0 0
        %1031 = vmatpush2.bf16.msra.mxu0 0
        %1032 = vmatprep.subr.bf16.mxu0 0
        %1033 = vmatpush2.bf16.msra.mxu0 0
        %1034 = vmatprep.subr.bf16.mxu0 0
        %1035 = vmatpush2.bf16.msra.mxu0 0
        %1036 = vmatprep.mubr.bf16.mxu0 0
        %1037 = vmatmul.mubr.bf16.gmra.mxu0 %v442
        %v1038 = vpop.f32.mrf.mxu0
        %v1039 = vadd.f32 %v389, %v1038
        %v1040 = vpop.f32.mrf.mxu0
        %v1041 = vadd.f32 %v393, %v1040
        %v1042 = vpop.f32.mrf.mxu0
        %v1043 = vadd.f32 %v389, %v1042
        %v1044 = vpop.f32.mrf.mxu0
        %v1045 = vadd.f32 %v393, %v1044
        %1046 = vmatprep.mubr.bf16.mxu0 0
        %1047 = vmatmul.mubr.bf16.gmra.mxu0 %v443
        %v1048 = vpop.f32.mrf.mxu0
        %v1049 = vadd.f32 %v389, %v1048
        %v1050 = vpop.f32.mrf.mxu0
        %v1051 = vadd.f32 %v393, %v1050
        %v1052 = vpop.f32.mrf.mxu0
        %v1053 = vadd.f32 %v389, %v1052
        %v1054 = vpop.f32.mrf.mxu0
        %v1055 = vadd.f32 %v393, %v1054
        %1056 = vmatprep.mubr.bf16.mxu0 0
        %1057 = vmatmul.mubr.bf16.gmra.mxu0 %v444
        %v1058 = vpop.f32.mrf.mxu0
        %v1059 = vadd.f32 %v389, %v1058
        %v1060 = vpop.f32.mrf.mxu0
        %v1061 = vadd.f32 %v393, %v1060
        %v1062 = vpop.f32.mrf.mxu0
        %v1063 = vadd.f32 %v389, %v1062
        %v1064 = vpop.f32.mrf.mxu0
        %v1065 = vadd.f32 %v393, %v1064
        %1066 = vmatprep.mubr.bf16.mxu0 0
        %1067 = vmatmul.mubr.bf16.gmra.mxu0 %v445
        %v1068 = vpop.f32.mrf.mxu0
        %v1069 = vadd.f32 %v389, %v1068
        %v1070 = vpop.f32.mrf.mxu0
        %v1071 = vadd.f32 %v393, %v1070
        %v1072 = vpop.f32.mrf.mxu0
        %v1073 = vadd.f32 %v389, %v1072
        %v1074 = vpop.f32.mrf.mxu0
        %v1075 = vadd.f32 %v393, %v1074
        %1076 = vmatprep.mubr.bf16.mxu0 0
        %1077 = vmatmul.mubr.bf16.gmra.mxu0 %v446
        %v1078 = vpop.f32.mrf.mxu0
        %v1079 = vadd.f32 %v389, %v1078
        %v1080 = vpop.f32.mrf.mxu0
        %v1081 = vadd.f32 %v393, %v1080
        %v1082 = vpop.f32.mrf.mxu0
        %v1083 = vadd.f32 %v389, %v1082
        %v1084 = vpop.f32.mrf.mxu0
        %v1085 = vadd.f32 %v393, %v1084
        %1086 = vmatprep.mubr.bf16.mxu0 0
        %1087 = vmatmul.mubr.bf16.gmra.mxu0 %v447
        %v1088 = vpop.f32.mrf.mxu0
        %v1089 = vadd.f32 %v389, %v1088
        %v1090 = vpop.f32.mrf.mxu0
        %v1091 = vadd.f32 %v393, %v1090
        %v1092 = vpop.f32.mrf.mxu0
        %v1093 = vadd.f32 %v389, %v1092
        %v1094 = vpop.f32.mrf.mxu0
        %v1095 = vadd.f32 %v393, %v1094
        %1096 = vmatprep.mubr.bf16.mxu0 0
        %1097 = vmatmul.mubr.bf16.gmra.mxu0 %v448
        %v1098 = vpop.f32.mrf.mxu0
        %v1099 = vadd.f32 %v389, %v1098
        %v1100 = vpop.f32.mrf.mxu0
        %v1101 = vadd.f32 %v393, %v1100
        %v1102 = vpop.f32.mrf.mxu0
        %v1103 = vadd.f32 %v389, %v1102
        %v1104 = vpop.f32.mrf.mxu0
        %v1105 = vadd.f32 %v393, %v1104
        %1106 = vmatprep.mubr.bf16.mxu0 0
        %1107 = vmatmul.mubr.bf16.gmra.mxu0 %v449
        %v1108 = vpop.f32.mrf.mxu0
        %v1109 = vadd.f32 %v389, %v1108
        %v1110 = vpop.f32.mrf.mxu0
        %v1111 = vadd.f32 %v393, %v1110
        %v1112 = vpop.f32.mrf.mxu0
        %v1113 = vadd.f32 %v389, %v1112
        %v1114 = vpop.f32.mrf.mxu0
        %v1115 = vadd.f32 %v393, %v1114
        %1116 = vdwg.mxu0
        %1117 = vmatprep.subr.bf16.mxu0 %v713
        %1118 = vmatpush1.bf16.msra.mxu0 %v712
        %1119 = vmatprep.subr.bf16.mxu0 %v705
        %1120 = vmatpush1.bf16.msra.mxu0 %v704
        %1121 = vmatprep.subr.bf16.mxu0 %v697
        %1122 = vmatpush1.bf16.msra.mxu0 %v696
        %1123 = vmatprep.subr.bf16.mxu0 %v689
        %1124 = vmatpush1.bf16.msra.mxu0 %v688
        %1125 = vmatprep.subr.bf16.mxu0 %v681
        %1126 = vmatpush1.bf16.msra.mxu0 %v680
        %1127 = vmatprep.subr.bf16.mxu0 %v673
        %1128 = vmatpush1.bf16.msra.mxu0 %v672
        %1129 = vmatprep.subr.bf16.mxu0 %v665
        %1130 = vmatpush1.bf16.msra.mxu0 %v664
        %1131 = vmatprep.subr.bf16.mxu0 %v657
        %1132 = vmatpush1.bf16.msra.mxu0 %v656
        %1133 = vmatprep.subr.bf16.mxu0 0
        %1134 = vmatpush2.bf16.msra.mxu0 0
        %1135 = vmatprep.subr.bf16.mxu0 0
        %1136 = vmatpush2.bf16.msra.mxu0 0
        %1137 = vmatprep.subr.bf16.mxu0 0
        %1138 = vmatpush2.bf16.msra.mxu0 0
        %1139 = vmatprep.subr.bf16.mxu0 0
        %1140 = vmatpush2.bf16.msra.mxu0 0
        %1141 = vmatprep.subr.bf16.mxu0 0
        %1142 = vmatpush2.bf16.msra.mxu0 0
        %1143 = vmatprep.subr.bf16.mxu0 0
        %1144 = vmatpush2.bf16.msra.mxu0 0
        %1145 = vmatprep.subr.bf16.mxu0 0
        %1146 = vmatpush2.bf16.msra.mxu0 0
        %1147 = vmatprep.subr.bf16.mxu0 0
        %1148 = vmatpush2.bf16.msra.mxu0 0
        %1149 = vmatprep.mubr.bf16.mxu0 0
        %1150 = vmatmul.mubr.bf16.gmra.mxu0 %v442
        %v1151 = vpop.f32.mrf.mxu0
        %v1152 = vadd.f32 %v397, %v1151
        %v1153 = vpop.f32.mrf.mxu0
        %v1154 = vadd.f32 %v401, %v1153
        %v1155 = vpop.f32.mrf.mxu0
        %v1156 = vadd.f32 %v397, %v1155
        %v1157 = vpop.f32.mrf.mxu0
        %v1158 = vadd.f32 %v401, %v1157
        %1159 = vmatprep.mubr.bf16.mxu0 0
        %1160 = vmatmul.mubr.bf16.gmra.mxu0 %v443
        %v1161 = vpop.f32.mrf.mxu0
        %v1162 = vadd.f32 %v397, %v1161
        %v1163 = vpop.f32.mrf.mxu0
        %v1164 = vadd.f32 %v401, %v1163
        %v1165 = vpop.f32.mrf.mxu0
        %v1166 = vadd.f32 %v397, %v1165
        %v1167 = vpop.f32.mrf.mxu0
        %v1168 = vadd.f32 %v401, %v1167
        %1169 = vmatprep.mubr.bf16.mxu0 0
        %1170 = vmatmul.mubr.bf16.gmra.mxu0 %v444
        %v1171 = vpop.f32.mrf.mxu0
        %v1172 = vadd.f32 %v397, %v1171
        %v1173 = vpop.f32.mrf.mxu0
        %v1174 = vadd.f32 %v401, %v1173
        %v1175 = vpop.f32.mrf.mxu0
        %v1176 = vadd.f32 %v397, %v1175
        %v1177 = vpop.f32.mrf.mxu0
        %v1178 = vadd.f32 %v401, %v1177
        %1179 = vmatprep.mubr.bf16.mxu0 0
        %1180 = vmatmul.mubr.bf16.gmra.mxu0 %v445
        %v1181 = vpop.f32.mrf.mxu0
        %v1182 = vadd.f32 %v397, %v1181
        %v1183 = vpop.f32.mrf.mxu0
        %v1184 = vadd.f32 %v401, %v1183
        %v1185 = vpop.f32.mrf.mxu0
        %v1186 = vadd.f32 %v397, %v1185
        %v1187 = vpop.f32.mrf.mxu0
        %v1188 = vadd.f32 %v401, %v1187
        %1189 = vmatprep.mubr.bf16.mxu0 0
        %1190 = vmatmul.mubr.bf16.gmra.mxu0 %v446
        %v1191 = vpop.f32.mrf.mxu0
        %v1192 = vadd.f32 %v397, %v1191
        %v1193 = vpop.f32.mrf.mxu0
        %v1194 = vadd.f32 %v401, %v1193
        %v1195 = vpop.f32.mrf.mxu0
        %v1196 = vadd.f32 %v397, %v1195
        %v1197 = vpop.f32.mrf.mxu0
        %v1198 = vadd.f32 %v401, %v1197
        %1199 = vmatprep.mubr.bf16.mxu0 0
        %1200 = vmatmul.mubr.bf16.gmra.mxu0 %v447
        %v1201 = vpop.f32.mrf.mxu0
        %v1202 = vadd.f32 %v397, %v1201
        %v1203 = vpop.f32.mrf.mxu0
        %v1204 = vadd.f32 %v401, %v1203
        %v1205 = vpop.f32.mrf.mxu0
        %v1206 = vadd.f32 %v397, %v1205
        %v1207 = vpop.f32.mrf.mxu0
        %v1208 = vadd.f32 %v401, %v1207
        %1209 = vmatprep.mubr.bf16.mxu0 0
        %1210 = vmatmul.mubr.bf16.gmra.mxu0 %v448
        %v1211 = vpop.f32.mrf.mxu0
        %v1212 = vadd.f32 %v397, %v1211
        %v1213 = vpop.f32.mrf.mxu0
        %v1214 = vadd.f32 %v401, %v1213
        %v1215 = vpop.f32.mrf.mxu0
        %v1216 = vadd.f32 %v397, %v1215
        %v1217 = vpop.f32.mrf.mxu0
        %v1218 = vadd.f32 %v401, %v1217
        %1219 = vmatprep.mubr.bf16.mxu0 0
        %1220 = vmatmul.mubr.bf16.gmra.mxu0 %v449
        %v1221 = vpop.f32.mrf.mxu0
        %v1222 = vadd.f32 %v397, %v1221
        %v1223 = vpop.f32.mrf.mxu0
        %v1224 = vadd.f32 %v401, %v1223
        %v1225 = vpop.f32.mrf.mxu0
        %v1226 = vadd.f32 %v397, %v1225
        %v1227 = vpop.f32.mrf.mxu0
        %v1228 = vadd.f32 %v401, %v1227
        %1229 = vdwg.mxu0
        %vm1230 = vcmp.ge.f32.partialorder %v813, 0.0
        %vm1231 = vcmp.ge.f32.partialorder %v815, 0.0
        %vm1232 = vcmp.ge.f32.partialorder %v926, 0.0
        %vm1233 = vcmp.ge.f32.partialorder %v928, 0.0
        %vm1234 = vcmp.ge.f32.partialorder %v1039, 0.0
        %vm1235 = vcmp.ge.f32.partialorder %v1041, 0.0
        %vm1236 = vcmp.ge.f32.partialorder %v1152, 0.0
        %vm1237 = vcmp.ge.f32.partialorder %v1154, 0.0
        %vm1238 = vcmp.ge.f32.partialorder %v817, 0.0
        %vm1239 = vcmp.ge.f32.partialorder %v819, 0.0
        %vm1240 = vcmp.ge.f32.partialorder %v930, 0.0
        %vm1241 = vcmp.ge.f32.partialorder %v932, 0.0
        %vm1242 = vcmp.ge.f32.partialorder %v1043, 0.0
        %vm1243 = vcmp.ge.f32.partialorder %v1045, 0.0
        %vm1244 = vcmp.ge.f32.partialorder %v1156, 0.0
        %vm1245 = vcmp.ge.f32.partialorder %v1158, 0.0
        %vm1246 = vcmp.ge.f32.partialorder %v823, 0.0
        %vm1247 = vcmp.ge.f32.partialorder %v825, 0.0
        %vm1248 = vcmp.ge.f32.partialorder %v936, 0.0
        %vm1249 = vcmp.ge.f32.partialorder %v938, 0.0
        %vm1250 = vcmp.ge.f32.partialorder %v1049, 0.0
        %vm1251 = vcmp.ge.f32.partialorder %v1051, 0.0
        %vm1252 = vcmp.ge.f32.partialorder %v1162, 0.0
        %vm1253 = vcmp.ge.f32.partialorder %v1164, 0.0
        %vm1254 = vcmp.ge.f32.partialorder %v827, 0.0
        %vm1255 = vcmp.ge.f32.partialorder %v829, 0.0
        %vm1256 = vcmp.ge.f32.partialorder %v940, 0.0
        %vm1257 = vcmp.ge.f32.partialorder %v942, 0.0
        %vm1258 = vcmp.ge.f32.partialorder %v1053, 0.0
        %vm1259 = vcmp.ge.f32.partialorder %v1055, 0.0
        %vm1260 = vcmp.ge.f32.partialorder %v1166, 0.0
        %vm1261 = vcmp.ge.f32.partialorder %v1168, 0.0
        %vm1262 = vcmp.ge.f32.partialorder %v833, 0.0
        %vm1263 = vcmp.ge.f32.partialorder %v835, 0.0
        %vm1264 = vcmp.ge.f32.partialorder %v946, 0.0
        %vm1265 = vcmp.ge.f32.partialorder %v948, 0.0
        %vm1266 = vcmp.ge.f32.partialorder %v1059, 0.0
        %vm1267 = vcmp.ge.f32.partialorder %v1061, 0.0
        %vm1268 = vcmp.ge.f32.partialorder %v1172, 0.0
        %vm1269 = vcmp.ge.f32.partialorder %v1174, 0.0
        %vm1270 = vcmp.ge.f32.partialorder %v837, 0.0
        %vm1271 = vcmp.ge.f32.partialorder %v839, 0.0
        %vm1272 = vcmp.ge.f32.partialorder %v950, 0.0
        %vm1273 = vcmp.ge.f32.partialorder %v952, 0.0
        %vm1274 = vcmp.ge.f32.partialorder %v1063, 0.0
        %vm1275 = vcmp.ge.f32.partialorder %v1065, 0.0
        %vm1276 = vcmp.ge.f32.partialorder %v1176, 0.0
        %vm1277 = vcmp.ge.f32.partialorder %v1178, 0.0
        %vm1278 = vcmp.ge.f32.partialorder %v843, 0.0
        %vm1279 = vcmp.ge.f32.partialorder %v845, 0.0
        %vm1280 = vcmp.ge.f32.partialorder %v956, 0.0
        %vm1281 = vcmp.ge.f32.partialorder %v958, 0.0
        %vm1282 = vcmp.ge.f32.partialorder %v1069, 0.0
        %vm1283 = vcmp.ge.f32.partialorder %v1071, 0.0
        %vm1284 = vcmp.ge.f32.partialorder %v1182, 0.0
        %vm1285 = vcmp.ge.f32.partialorder %v1184, 0.0
        %vm1286 = vcmp.ge.f32.partialorder %v847, 0.0
        %vm1287 = vcmp.ge.f32.partialorder %v849, 0.0
        %vm1288 = vcmp.ge.f32.partialorder %v960, 0.0
        %vm1289 = vcmp.ge.f32.partialorder %v962, 0.0
        %vm1290 = vcmp.ge.f32.partialorder %v1073, 0.0
        %vm1291 = vcmp.ge.f32.partialorder %v1075, 0.0
        %vm1292 = vcmp.ge.f32.partialorder %v1186, 0.0
        %vm1293 = vcmp.ge.f32.partialorder %v1188, 0.0
        %vm1294 = vcmp.ge.f32.partialorder %v853, 0.0
        %vm1295 = vcmp.ge.f32.partialorder %v855, 0.0
        %vm1296 = vcmp.ge.f32.partialorder %v966, 0.0
        %vm1297 = vcmp.ge.f32.partialorder %v968, 0.0
        %vm1298 = vcmp.ge.f32.partialorder %v1079, 0.0
        %vm1299 = vcmp.ge.f32.partialorder %v1081, 0.0
        %vm1300 = vcmp.ge.f32.partialorder %v1192, 0.0
        %vm1301 = vcmp.ge.f32.partialorder %v1194, 0.0
        %vm1302 = vcmp.ge.f32.partialorder %v857, 0.0
        %vm1303 = vcmp.ge.f32.partialorder %v859, 0.0
        %vm1304 = vcmp.ge.f32.partialorder %v970, 0.0
        %vm1305 = vcmp.ge.f32.partialorder %v972, 0.0
        %vm1306 = vcmp.ge.f32.partialorder %v1083, 0.0
        %vm1307 = vcmp.ge.f32.partialorder %v1085, 0.0
        %vm1308 = vcmp.ge.f32.partialorder %v1196, 0.0
        %vm1309 = vcmp.ge.f32.partialorder %v1198, 0.0
        %vm1310 = vcmp.ge.f32.partialorder %v863, 0.0
        %vm1311 = vcmp.ge.f32.partialorder %v865, 0.0
        %vm1312 = vcmp.ge.f32.partialorder %v976, 0.0
        %vm1313 = vcmp.ge.f32.partialorder %v978, 0.0
        %vm1314 = vcmp.ge.f32.partialorder %v1089, 0.0
        %vm1315 = vcmp.ge.f32.partialorder %v1091, 0.0
        %vm1316 = vcmp.ge.f32.partialorder %v1202, 0.0
        %vm1317 = vcmp.ge.f32.partialorder %v1204, 0.0
        %vm1318 = vcmp.ge.f32.partialorder %v867, 0.0
        %vm1319 = vcmp.ge.f32.partialorder %v869, 0.0
        %vm1320 = vcmp.ge.f32.partialorder %v980, 0.0
        %vm1321 = vcmp.ge.f32.partialorder %v982, 0.0
        %vm1322 = vcmp.ge.f32.partialorder %v1093, 0.0
        %vm1323 = vcmp.ge.f32.partialorder %v1095, 0.0
        %vm1324 = vcmp.ge.f32.partialorder %v1206, 0.0
        %vm1325 = vcmp.ge.f32.partialorder %v1208, 0.0
        %vm1326 = vcmp.ge.f32.partialorder %v873, 0.0
        %vm1327 = vcmp.ge.f32.partialorder %v875, 0.0
        %vm1328 = vcmp.ge.f32.partialorder %v986, 0.0
        %vm1329 = vcmp.ge.f32.partialorder %v988, 0.0
        %vm1330 = vcmp.ge.f32.partialorder %v1099, 0.0
        %vm1331 = vcmp.ge.f32.partialorder %v1101, 0.0
        %vm1332 = vcmp.ge.f32.partialorder %v1212, 0.0
        %vm1333 = vcmp.ge.f32.partialorder %v1214, 0.0
        %vm1334 = vcmp.ge.f32.partialorder %v877, 0.0
        %vm1335 = vcmp.ge.f32.partialorder %v879, 0.0
        %vm1336 = vcmp.ge.f32.partialorder %v990, 0.0
        %vm1337 = vcmp.ge.f32.partialorder %v992, 0.0
        %vm1338 = vcmp.ge.f32.partialorder %v1103, 0.0
        %vm1339 = vcmp.ge.f32.partialorder %v1105, 0.0
        %vm1340 = vcmp.ge.f32.partialorder %v1216, 0.0
        %vm1341 = vcmp.ge.f32.partialorder %v1218, 0.0
        %vm1342 = vcmp.ge.f32.partialorder %v883, 0.0
        %vm1343 = vcmp.ge.f32.partialorder %v885, 0.0
        %vm1344 = vcmp.ge.f32.partialorder %v996, 0.0
        %vm1345 = vcmp.ge.f32.partialorder %v998, 0.0
        %vm1346 = vcmp.ge.f32.partialorder %v1109, 0.0
        %vm1347 = vcmp.ge.f32.partialorder %v1111, 0.0
        %vm1348 = vcmp.ge.f32.partialorder %v1222, 0.0
        %vm1349 = vcmp.ge.f32.partialorder %v1224, 0.0
        %vm1350 = vcmp.ge.f32.partialorder %v887, 0.0
        %vm1351 = vcmp.ge.f32.partialorder %v889, 0.0
        %vm1352 = vcmp.ge.f32.partialorder %v1000, 0.0
        %vm1353 = vcmp.ge.f32.partialorder %v1002, 0.0
        %vm1354 = vcmp.ge.f32.partialorder %v1113, 0.0
        %vm1355 = vcmp.ge.f32.partialorder %v1115, 0.0
        %vm1356 = vcmp.ge.f32.partialorder %v1226, 0.0
        %vm1357 = vcmp.ge.f32.partialorder %v1228, 0.0
        %v1358 = vmul.f32 %v813, 0.22916667
        %v1359 = vmul.f32 %v815, 0.22916667
        %v1360 = vmul.f32 %v926, 0.22916667
        %v1361 = vmul.f32 %v928, 0.22916667
        %v1362 = vmul.f32 %v1039, 0.22916667
        %v1363 = vmul.f32 %v1041, 0.22916667
        %v1364 = vmul.f32 %v1152, 0.22916667
        %v1365 = vmul.f32 %v1154, 0.22916667
        %v1366 = vmul.f32 %v817, 0.22916667
        %v1367 = vmul.f32 %v819, 0.22916667
        %v1368 = vmul.f32 %v930, 0.22916667
        %v1369 = vmul.f32 %v932, 0.22916667
        %v1370 = vmul.f32 %v1043, 0.22916667
        %v1371 = vmul.f32 %v1045, 0.22916667
        %v1372 = vmul.f32 %v1156, 0.22916667
        %v1373 = vmul.f32 %v1158, 0.22916667
        %v1374 = vmul.f32 %v823, 0.22916667
        %v1375 = vmul.f32 %v825, 0.22916667
        %v1376 = vmul.f32 %v936, 0.22916667
        %v1377 = vmul.f32 %v938, 0.22916667
        %v1378 = vmul.f32 %v1049, 0.22916667
        %v1379 = vmul.f32 %v1051, 0.22916667
        %v1380 = vmul.f32 %v1162, 0.22916667
        %v1381 = vmul.f32 %v1164, 0.22916667
        %v1382 = vmul.f32 %v827, 0.22916667
        %v1383 = vmul.f32 %v829, 0.22916667
        %v1384 = vmul.f32 %v940, 0.22916667
        %v1385 = vmul.f32 %v942, 0.22916667
        %v1386 = vmul.f32 %v1053, 0.22916667
        %v1387 = vmul.f32 %v1055, 0.22916667
        %v1388 = vmul.f32 %v1166, 0.22916667
        %v1389 = vmul.f32 %v1168, 0.22916667
        %v1390 = vmul.f32 %v833, 0.22916667
        %v1391 = vmul.f32 %v835, 0.22916667
        %v1392 = vmul.f32 %v946, 0.22916667
        %v1393 = vmul.f32 %v948, 0.22916667
        %v1394 = vmul.f32 %v1059, 0.22916667
        %v1395 = vmul.f32 %v1061, 0.22916667
        %v1396 = vmul.f32 %v1172, 0.22916667
        %v1397 = vmul.f32 %v1174, 0.22916667
        %v1398 = vmul.f32 %v837, 0.22916667
        %v1399 = vmul.f32 %v839, 0.22916667
        %v1400 = vmul.f32 %v950, 0.22916667
        %v1401 = vmul.f32 %v952, 0.22916667
        %v1402 = vmul.f32 %v1063, 0.22916667
        %v1403 = vmul.f32 %v1065, 0.22916667
        %v1404 = vmul.f32 %v1176, 0.22916667
        %v1405 = vmul.f32 %v1178, 0.22916667
        %v1406 = vmul.f32 %v843, 0.22916667
        %v1407 = vmul.f32 %v845, 0.22916667
        %v1408 = vmul.f32 %v956, 0.22916667
        %v1409 = vmul.f32 %v958, 0.22916667
        %v1410 = vmul.f32 %v1069, 0.22916667
        %v1411 = vmul.f32 %v1071, 0.22916667
        %v1412 = vmul.f32 %v1182, 0.22916667
        %v1413 = vmul.f32 %v1184, 0.22916667
        %v1414 = vmul.f32 %v847, 0.22916667
        %v1415 = vmul.f32 %v849, 0.22916667
        %v1416 = vmul.f32 %v960, 0.22916667
        %v1417 = vmul.f32 %v962, 0.22916667
        %v1418 = vmul.f32 %v1073, 0.22916667
        %v1419 = vmul.f32 %v1075, 0.22916667
        %v1420 = vmul.f32 %v1186, 0.22916667
        %v1421 = vmul.f32 %v1188, 0.22916667
        %v1422 = vmul.f32 %v853, 0.22916667
        %v1423 = vmul.f32 %v855, 0.22916667
        %v1424 = vmul.f32 %v966, 0.22916667
        %v1425 = vmul.f32 %v968, 0.22916667
        %v1426 = vmul.f32 %v1079, 0.22916667
        %v1427 = vmul.f32 %v1081, 0.22916667
        %v1428 = vmul.f32 %v1192, 0.22916667
        %v1429 = vmul.f32 %v1194, 0.22916667
        %v1430 = vmul.f32 %v857, 0.22916667
        %v1431 = vmul.f32 %v859, 0.22916667
        %v1432 = vmul.f32 %v970, 0.22916667
        %v1433 = vmul.f32 %v972, 0.22916667
        %v1434 = vmul.f32 %v1083, 0.22916667
        %v1435 = vmul.f32 %v1085, 0.22916667
        %v1436 = vmul.f32 %v1196, 0.22916667
        %v1437 = vmul.f32 %v1198, 0.22916667
        %v1438 = vmul.f32 %v863, 0.22916667
        %v1439 = vmul.f32 %v865, 0.22916667
        %v1440 = vmul.f32 %v976, 0.22916667
        %v1441 = vmul.f32 %v978, 0.22916667
        %v1442 = vmul.f32 %v1089, 0.22916667
        %v1443 = vmul.f32 %v1091, 0.22916667
        %v1444 = vmul.f32 %v1202, 0.22916667
        %v1445 = vmul.f32 %v1204, 0.22916667
        %v1446 = vmul.f32 %v867, 0.22916667
        %v1447 = vmul.f32 %v869, 0.22916667
        %v1448 = vmul.f32 %v980, 0.22916667
        %v1449 = vmul.f32 %v982, 0.22916667
        %v1450 = vmul.f32 %v1093, 0.22916667
        %v1451 = vmul.f32 %v1095, 0.22916667
        %v1452 = vmul.f32 %v1206, 0.22916667
        %v1453 = vmul.f32 %v1208, 0.22916667
        %v1454 = vmul.f32 %v873, 0.22916667
        %v1455 = vmul.f32 %v875, 0.22916667
        %v1456 = vmul.f32 %v986, 0.22916667
        %v1457 = vmul.f32 %v988, 0.22916667
        %v1458 = vmul.f32 %v1099, 0.22916667
        %v1459 = vmul.f32 %v1101, 0.22916667
        %v1460 = vmul.f32 %v1212, 0.22916667
        %v1461 = vmul.f32 %v1214, 0.22916667
        %v1462 = vmul.f32 %v877, 0.22916667
        %v1463 = vmul.f32 %v879, 0.22916667
        %v1464 = vmul.f32 %v990, 0.22916667
        %v1465 = vmul.f32 %v992, 0.22916667
        %v1466 = vmul.f32 %v1103, 0.22916667
        %v1467 = vmul.f32 %v1105, 0.22916667
        %v1468 = vmul.f32 %v1216, 0.22916667
        %v1469 = vmul.f32 %v1218, 0.22916667
        %v1470 = vmul.f32 %v883, 0.22916667
        %v1471 = vmul.f32 %v885, 0.22916667
        %v1472 = vmul.f32 %v996, 0.22916667
        %v1473 = vmul.f32 %v998, 0.22916667
        %v1474 = vmul.f32 %v1109, 0.22916667
        %v1475 = vmul.f32 %v1111, 0.22916667
        %v1476 = vmul.f32 %v1222, 0.22916667
        %v1477 = vmul.f32 %v1224, 0.22916667
        %v1478 = vmul.f32 %v887, 0.22916667
        %v1479 = vmul.f32 %v889, 0.22916667
        %v1480 = vmul.f32 %v1000, 0.22916667
        %v1481 = vmul.f32 %v1002, 0.22916667
        %v1482 = vmul.f32 %v1113, 0.22916667
        %v1483 = vmul.f32 %v1115, 0.22916667
        %v1484 = vmul.f32 %v1226, 0.22916667
        %v1485 = vmul.f32 %v1228, 0.22916667
        %v1486 = vsel %vm1230, %v813, %v1358
        %v1487 = vsel %vm1231, %v815, %v1359
        %v1488 = vsel %vm1232, %v926, %v1360
        %v1489 = vsel %vm1233, %v928, %v1361
        %v1490 = vsel %vm1234, %v1039, %v1362
        %v1491 = vsel %vm1235, %v1041, %v1363
        %v1492 = vsel %vm1236, %v1152, %v1364
        %v1493 = vsel %vm1237, %v1154, %v1365
        %v1494 = vsel %vm1238, %v817, %v1366
        %v1495 = vsel %vm1239, %v819, %v1367
        %v1496 = vsel %vm1240, %v930, %v1368
        %v1497 = vsel %vm1241, %v932, %v1369
        %v1498 = vsel %vm1242, %v1043, %v1370
        %v1499 = vsel %vm1243, %v1045, %v1371
        %v1500 = vsel %vm1244, %v1156, %v1372
        %v1501 = vsel %vm1245, %v1158, %v1373
        %v1502 = vsel %vm1246, %v823, %v1374
        %v1503 = vsel %vm1247, %v825, %v1375
        %v1504 = vsel %vm1248, %v936, %v1376
        %v1505 = vsel %vm1249, %v938, %v1377
        %v1506 = vsel %vm1250, %v1049, %v1378
        %v1507 = vsel %vm1251, %v1051, %v1379
        %v1508 = vsel %vm1252, %v1162, %v1380
        %v1509 = vsel %vm1253, %v1164, %v1381
        %v1510 = vsel %vm1254, %v827, %v1382
        %v1511 = vsel %vm1255, %v829, %v1383
        %v1512 = vsel %vm1256, %v940, %v1384
        %v1513 = vsel %vm1257, %v942, %v1385
        %v1514 = vsel %vm1258, %v1053, %v1386
        %v1515 = vsel %vm1259, %v1055, %v1387
        %v1516 = vsel %vm1260, %v1166, %v1388
        %v1517 = vsel %vm1261, %v1168, %v1389
        %v1518 = vsel %vm1262, %v833, %v1390
        %v1519 = vsel %vm1263, %v835, %v1391
        %v1520 = vsel %vm1264, %v946, %v1392
        %v1521 = vsel %vm1265, %v948, %v1393
        %v1522 = vsel %vm1266, %v1059, %v1394
        %v1523 = vsel %vm1267, %v1061, %v1395
        %v1524 = vsel %vm1268, %v1172, %v1396
        %v1525 = vsel %vm1269, %v1174, %v1397
        %v1526 = vsel %vm1270, %v837, %v1398
        %v1527 = vsel %vm1271, %v839, %v1399
        %v1528 = vsel %vm1272, %v950, %v1400
        %v1529 = vsel %vm1273, %v952, %v1401
        %v1530 = vsel %vm1274, %v1063, %v1402
        %v1531 = vsel %vm1275, %v1065, %v1403
        %v1532 = vsel %vm1276, %v1176, %v1404
        %v1533 = vsel %vm1277, %v1178, %v1405
        %v1534 = vsel %vm1278, %v843, %v1406
        %v1535 = vsel %vm1279, %v845, %v1407
        %v1536 = vsel %vm1280, %v956, %v1408
        %v1537 = vsel %vm1281, %v958, %v1409
        %v1538 = vsel %vm1282, %v1069, %v1410
        %v1539 = vsel %vm1283, %v1071, %v1411
        %v1540 = vsel %vm1284, %v1182, %v1412
        %v1541 = vsel %vm1285, %v1184, %v1413
        %v1542 = vsel %vm1286, %v847, %v1414
        %v1543 = vsel %vm1287, %v849, %v1415
        %v1544 = vsel %vm1288, %v960, %v1416
        %v1545 = vsel %vm1289, %v962, %v1417
        %v1546 = vsel %vm1290, %v1073, %v1418
        %v1547 = vsel %vm1291, %v1075, %v1419
        %v1548 = vsel %vm1292, %v1186, %v1420
        %v1549 = vsel %vm1293, %v1188, %v1421
        %v1550 = vsel %vm1294, %v853, %v1422
        %v1551 = vsel %vm1295, %v855, %v1423
        %v1552 = vsel %vm1296, %v966, %v1424
        %v1553 = vsel %vm1297, %v968, %v1425
        %v1554 = vsel %vm1298, %v1079, %v1426
        %v1555 = vsel %vm1299, %v1081, %v1427
        %v1556 = vsel %vm1300, %v1192, %v1428
        %v1557 = vsel %vm1301, %v1194, %v1429
        %v1558 = vsel %vm1302, %v857, %v1430
        %v1559 = vsel %vm1303, %v859, %v1431
        %v1560 = vsel %vm1304, %v970, %v1432
        %v1561 = vsel %vm1305, %v972, %v1433
        %v1562 = vsel %vm1306, %v1083, %v1434
        %v1563 = vsel %vm1307, %v1085, %v1435
        %v1564 = vsel %vm1308, %v1196, %v1436
        %v1565 = vsel %vm1309, %v1198, %v1437
        %v1566 = vsel %vm1310, %v863, %v1438
        %v1567 = vsel %vm1311, %v865, %v1439
        %v1568 = vsel %vm1312, %v976, %v1440
        %v1569 = vsel %vm1313, %v978, %v1441
        %v1570 = vsel %vm1314, %v1089, %v1442
        %v1571 = vsel %vm1315, %v1091, %v1443
        %v1572 = vsel %vm1316, %v1202, %v1444
        %v1573 = vsel %vm1317, %v1204, %v1445
        %v1574 = vsel %vm1318, %v867, %v1446
        %v1575 = vsel %vm1319, %v869, %v1447
        %v1576 = vsel %vm1320, %v980, %v1448
        %v1577 = vsel %vm1321, %v982, %v1449
        %v1578 = vsel %vm1322, %v1093, %v1450
        %v1579 = vsel %vm1323, %v1095, %v1451
        %v1580 = vsel %vm1324, %v1206, %v1452
        %v1581 = vsel %vm1325, %v1208, %v1453
        %v1582 = vsel %vm1326, %v873, %v1454
        %v1583 = vsel %vm1327, %v875, %v1455
        %v1584 = vsel %vm1328, %v986, %v1456
        %v1585 = vsel %vm1329, %v988, %v1457
        %v1586 = vsel %vm1330, %v1099, %v1458
        %v1587 = vsel %vm1331, %v1101, %v1459
        %v1588 = vsel %vm1332, %v1212, %v1460
        %v1589 = vsel %vm1333, %v1214, %v1461
        %v1590 = vsel %vm1334, %v877, %v1462
        %v1591 = vsel %vm1335, %v879, %v1463
        %v1592 = vsel %vm1336, %v990, %v1464
        %v1593 = vsel %vm1337, %v992, %v1465
        %v1594 = vsel %vm1338, %v1103, %v1466
        %v1595 = vsel %vm1339, %v1105, %v1467
        %v1596 = vsel %vm1340, %v1216, %v1468
        %v1597 = vsel %vm1341, %v1218, %v1469
        %v1598 = vsel %vm1342, %v883, %v1470
        %v1599 = vsel %vm1343, %v885, %v1471
        %v1600 = vsel %vm1344, %v996, %v1472
        %v1601 = vsel %vm1345, %v998, %v1473
        %v1602 = vsel %vm1346, %v1109, %v1474
        %v1603 = vsel %vm1347, %v1111, %v1475
        %v1604 = vsel %vm1348, %v1222, %v1476
        %v1605 = vsel %vm1349, %v1224, %v1477
        %v1606 = vsel %vm1350, %v887, %v1478
        %v1607 = vsel %vm1351, %v889, %v1479
        %v1608 = vsel %vm1352, %v1000, %v1480
        %v1609 = vsel %vm1353, %v1002, %v1481
        %v1610 = vsel %vm1354, %v1113, %v1482
        %v1611 = vsel %vm1355, %v1115, %v1483
        %v1612 = vsel %vm1356, %v1226, %v1484
        %v1613 = vsel %vm1357, %v1228, %v1485
        %v1614 = vpack.c.bf16 %v1494, %v1486
        %v1615 = vpack.c.bf16 %v1495, %v1487
        %v1616 = vpack.c.bf16 %v1496, %v1488
        %v1617 = vpack.c.bf16 %v1497, %v1489
        %v1618 = vpack.c.bf16 %v1498, %v1490
        %v1619 = vpack.c.bf16 %v1499, %v1491
        %v1620 = vpack.c.bf16 %v1500, %v1492
        %v1621 = vpack.c.bf16 %v1501, %v1493
        %v1622 = vpack.c.bf16 %v1510, %v1502
        %v1623 = vpack.c.bf16 %v1511, %v1503
        %v1624 = vpack.c.bf16 %v1512, %v1504
        %v1625 = vpack.c.bf16 %v1513, %v1505
        %v1626 = vpack.c.bf16 %v1514, %v1506
        %v1627 = vpack.c.bf16 %v1515, %v1507
        %v1628 = vpack.c.bf16 %v1516, %v1508
        %v1629 = vpack.c.bf16 %v1517, %v1509
        %v1630 = vpack.c.bf16 %v1526, %v1518
        %v1631 = vpack.c.bf16 %v1527, %v1519
        %v1632 = vpack.c.bf16 %v1528, %v1520
        %v1633 = vpack.c.bf16 %v1529, %v1521
        %v1634 = vpack.c.bf16 %v1530, %v1522
        %v1635 = vpack.c.bf16 %v1531, %v1523
        %v1636 = vpack.c.bf16 %v1532, %v1524
        %v1637 = vpack.c.bf16 %v1533, %v1525
        %v1638 = vpack.c.bf16 %v1542, %v1534
        %v1639 = vpack.c.bf16 %v1543, %v1535
        %v1640 = vpack.c.bf16 %v1544, %v1536
        %v1641 = vpack.c.bf16 %v1545, %v1537
        %v1642 = vpack.c.bf16 %v1546, %v1538
        %v1643 = vpack.c.bf16 %v1547, %v1539
        %v1644 = vpack.c.bf16 %v1548, %v1540
        %v1645 = vpack.c.bf16 %v1549, %v1541
        %v1646 = vpack.c.bf16 %v1558, %v1550
        %v1647 = vpack.c.bf16 %v1559, %v1551
        %v1648 = vpack.c.bf16 %v1560, %v1552
        %v1649 = vpack.c.bf16 %v1561, %v1553
        %v1650 = vpack.c.bf16 %v1562, %v1554
        %v1651 = vpack.c.bf16 %v1563, %v1555
        %v1652 = vpack.c.bf16 %v1564, %v1556
        %v1653 = vpack.c.bf16 %v1565, %v1557
        %v1654 = vpack.c.bf16 %v1574, %v1566
        %v1655 = vpack.c.bf16 %v1575, %v1567
        %v1656 = vpack.c.bf16 %v1576, %v1568
        %v1657 = vpack.c.bf16 %v1577, %v1569
        %v1658 = vpack.c.bf16 %v1578, %v1570
        %v1659 = vpack.c.bf16 %v1579, %v1571
        %v1660 = vpack.c.bf16 %v1580, %v1572
        %v1661 = vpack.c.bf16 %v1581, %v1573
        %v1662 = vpack.c.bf16 %v1590, %v1582
        %v1663 = vpack.c.bf16 %v1591, %v1583
        %v1664 = vpack.c.bf16 %v1592, %v1584
        %v1665 = vpack.c.bf16 %v1593, %v1585
        %v1666 = vpack.c.bf16 %v1594, %v1586
        %v1667 = vpack.c.bf16 %v1595, %v1587
        %v1668 = vpack.c.bf16 %v1596, %v1588
        %v1669 = vpack.c.bf16 %v1597, %v1589
        %v1670 = vpack.c.bf16 %v1606, %v1598
        %v1671 = vpack.c.bf16 %v1607, %v1599
        %v1672 = vpack.c.bf16 %v1608, %v1600
        %v1673 = vpack.c.bf16 %v1609, %v1601
        %v1674 = vpack.c.bf16 %v1610, %v1602
        %v1675 = vpack.c.bf16 %v1611, %v1603
        %v1676 = vpack.c.bf16 %v1612, %v1604
        %v1677 = vpack.c.bf16 %v1613, %v1605
        %v1678 = vld [vmem:[#allocation8] sm:$0xf]
        %v1679 = vld [vmem:[#allocation8 + $0x4] sm:$0xf]
        %v1680 = vld [vmem:[#allocation8 + $0x8] sm:$0xf]
        %v1681 = vld [vmem:[#allocation8 + $0xc] sm:$0xf]
        %v1682 = vld [vmem:[#allocation8 + $0x10] sm:$0xf]
        %v1683 = vld [vmem:[#allocation8 + $0x14] sm:$0xf]
        %v1684 = vld [vmem:[#allocation8 + $0x18] sm:$0xf]
        %v1685 = vld [vmem:[#allocation8 + $0x1c] sm:$0xf]
        %v1686 = vld [vmem:[#allocation8 + $0x20] sm:$0xf]
        %v1687 = vld [vmem:[#allocation8 + $0x24] sm:$0xf]
        %v1688 = vld [vmem:[#allocation8 + $0x28] sm:$0xf]
        %v1689 = vld [vmem:[#allocation8 + $0x2c] sm:$0xf]
        %v1690 = vld [vmem:[#allocation8 + $0x30] sm:$0xf]
        %v1691 = vld [vmem:[#allocation8 + $0x34] sm:$0xf]
        %v1692 = vld [vmem:[#allocation8 + $0x38] sm:$0xf]
        %v1693 = vld [vmem:[#allocation8 + $0x3c] sm:$0xf]
        %v1694 = vld [vmem:[#allocation8 + $0x40] sm:$0xf]
        %v1695 = vld [vmem:[#allocation8 + $0x44] sm:$0xf]
        %v1696 = vld [vmem:[#allocation8 + $0x48] sm:$0xf]
        %v1697 = vld [vmem:[#allocation8 + $0x4c] sm:$0xf]
        %v1698 = vld [vmem:[#allocation8 + $0x50] sm:$0xf]
        %v1699 = vld [vmem:[#allocation8 + $0x54] sm:$0xf]
        %v1700 = vld [vmem:[#allocation8 + $0x58] sm:$0xf]
        %v1701 = vld [vmem:[#allocation8 + $0x5c] sm:$0xf]
        %v1702 = vld [vmem:[#allocation8 + $0x60] sm:$0xf]
        %v1703 = vld [vmem:[#allocation8 + $0x64] sm:$0xf]
        %v1704 = vld [vmem:[#allocation8 + $0x68] sm:$0xf]
        %v1705 = vld [vmem:[#allocation8 + $0x6c] sm:$0xf]
        %v1706 = vld [vmem:[#allocation8 + $0x70] sm:$0xf]
        %v1707 = vld [vmem:[#allocation8 + $0x74] sm:$0xf]
        %v1708 = vld [vmem:[#allocation8 + $0x78] sm:$0xf]
        %v1709 = vld [vmem:[#allocation8 + $0x7c] sm:$0xf]
        %v1710 = vld [vmem:[#allocation8 + $0x80] sm:$0xf]
        %v1711 = vld [vmem:[#allocation8 + $0x84] sm:$0xf]
        %v1712 = vld [vmem:[#allocation8 + $0x88] sm:$0xf]
        %v1713 = vld [vmem:[#allocation8 + $0x8c] sm:$0xf]
        %v1714 = vld [vmem:[#allocation8 + $0x90] sm:$0xf]
        %v1715 = vld [vmem:[#allocation8 + $0x94] sm:$0xf]
        %v1716 = vld [vmem:[#allocation8 + $0x98] sm:$0xf]
        %v1717 = vld [vmem:[#allocation8 + $0x9c] sm:$0xf]
        %v1718 = vld [vmem:[#allocation8 + $0xa0] sm:$0xf]
        %v1719 = vld [vmem:[#allocation8 + $0xa4] sm:$0xf]
        %v1720 = vld [vmem:[#allocation8 + $0xa8] sm:$0xf]
        %v1721 = vld [vmem:[#allocation8 + $0xac] sm:$0xf]
        %v1722 = vld [vmem:[#allocation8 + $0xb0] sm:$0xf]
        %v1723 = vld [vmem:[#allocation8 + $0xb4] sm:$0xf]
        %v1724 = vld [vmem:[#allocation8 + $0xb8] sm:$0xf]
        %v1725 = vld [vmem:[#allocation8 + $0xbc] sm:$0xf]
        %v1726 = vld [vmem:[#allocation8 + $0xc0] sm:$0xf]
        %v1727 = vld [vmem:[#allocation8 + $0xc4] sm:$0xf]
        %v1728 = vld [vmem:[#allocation8 + $0xc8] sm:$0xf]
        %v1729 = vld [vmem:[#allocation8 + $0xcc] sm:$0xf]
        %v1730 = vld [vmem:[#allocation8 + $0xd0] sm:$0xf]
        %v1731 = vld [vmem:[#allocation8 + $0xd4] sm:$0xf]
        %v1732 = vld [vmem:[#allocation8 + $0xd8] sm:$0xf]
        %v1733 = vld [vmem:[#allocation8 + $0xdc] sm:$0xf]
        %v1734 = vld [vmem:[#allocation8 + $0xe0] sm:$0xf]
        %v1735 = vld [vmem:[#allocation8 + $0xe4] sm:$0xf]
        %v1736 = vld [vmem:[#allocation8 + $0xe8] sm:$0xf]
        %v1737 = vld [vmem:[#allocation8 + $0xec] sm:$0xf]
        %v1738 = vld [vmem:[#allocation8 + $0xf0] sm:$0xf]
        %v1739 = vld [vmem:[#allocation8 + $0xf4] sm:$0xf]
        %v1740 = vld [vmem:[#allocation8 + $0xf8] sm:$0xf]
        %v1741 = vld [vmem:[#allocation8 + $0xfc] sm:$0xf]
        %v1742 = vld [vmem:[#allocation8 + $0x100] sm:$0xf]
        %v1743 = vld [vmem:[#allocation8 + $0x104] sm:$0xf]
        %v1744 = vld [vmem:[#allocation8 + $0x108] sm:$0xf]
        %v1745 = vld [vmem:[#allocation8 + $0x10c] sm:$0xf]
        %v1746 = vld [vmem:[#allocation8 + $0x110] sm:$0xf]
        %v1747 = vld [vmem:[#allocation8 + $0x114] sm:$0xf]
        %v1748 = vld [vmem:[#allocation8 + $0x118] sm:$0xf]
        %v1749 = vld [vmem:[#allocation8 + $0x11c] sm:$0xf]
        %v1750 = vld [vmem:[#allocation8 + $0x120] sm:$0xf]
        %v1751 = vld [vmem:[#allocation8 + $0x124] sm:$0xf]
        %v1752 = vld [vmem:[#allocation8 + $0x128] sm:$0xf]
        %v1753 = vld [vmem:[#allocation8 + $0x12c] sm:$0xf]
        %v1754 = vld [vmem:[#allocation8 + $0x130] sm:$0xf]
        %v1755 = vld [vmem:[#allocation8 + $0x134] sm:$0xf]
        %v1756 = vld [vmem:[#allocation8 + $0x138] sm:$0xf]
        %v1757 = vld [vmem:[#allocation8 + $0x13c] sm:$0xf]
        %v1758 = vld [vmem:[#allocation8 + $0x140] sm:$0xf]
        %v1759 = vld [vmem:[#allocation8 + $0x144] sm:$0xf]
        %v1760 = vld [vmem:[#allocation8 + $0x148] sm:$0xf]
        %v1761 = vld [vmem:[#allocation8 + $0x14c] sm:$0xf]
        %v1762 = vld [vmem:[#allocation8 + $0x150] sm:$0xf]
        %v1763 = vld [vmem:[#allocation8 + $0x154] sm:$0xf]
        %v1764 = vld [vmem:[#allocation8 + $0x158] sm:$0xf]
        %v1765 = vld [vmem:[#allocation8 + $0x15c] sm:$0xf]
        %v1766 = vld [vmem:[#allocation8 + $0x160] sm:$0xf]
        %v1767 = vld [vmem:[#allocation8 + $0x164] sm:$0xf]
        %v1768 = vld [vmem:[#allocation8 + $0x168] sm:$0xf]
        %v1769 = vld [vmem:[#allocation8 + $0x16c] sm:$0xf]
        %v1770 = vld [vmem:[#allocation8 + $0x170] sm:$0xf]
        %v1771 = vld [vmem:[#allocation8 + $0x174] sm:$0xf]
        %v1772 = vld [vmem:[#allocation8 + $0x178] sm:$0xf]
        %v1773 = vld [vmem:[#allocation8 + $0x17c] sm:$0xf]
        %v1774 = vld [vmem:[#allocation8 + $0x180] sm:$0xf]
        %v1775 = vld [vmem:[#allocation8 + $0x184] sm:$0xf]
        %v1776 = vld [vmem:[#allocation8 + $0x188] sm:$0xf]
        %v1777 = vld [vmem:[#allocation8 + $0x18c] sm:$0xf]
        %v1778 = vld [vmem:[#allocation8 + $0x190] sm:$0xf]
        %v1779 = vld [vmem:[#allocation8 + $0x194] sm:$0xf]
        %v1780 = vld [vmem:[#allocation8 + $0x198] sm:$0xf]
        %v1781 = vld [vmem:[#allocation8 + $0x19c] sm:$0xf]
        %v1782 = vld [vmem:[#allocation8 + $0x1a0] sm:$0xf]
        %v1783 = vld [vmem:[#allocation8 + $0x1a4] sm:$0xf]
        %v1784 = vld [vmem:[#allocation8 + $0x1a8] sm:$0xf]
        %v1785 = vld [vmem:[#allocation8 + $0x1ac] sm:$0xf]
        %v1786 = vld [vmem:[#allocation8 + $0x1b0] sm:$0xf]
        %v1787 = vld [vmem:[#allocation8 + $0x1b4] sm:$0xf]
        %v1788 = vld [vmem:[#allocation8 + $0x1b8] sm:$0xf]
        %v1789 = vld [vmem:[#allocation8 + $0x1bc] sm:$0xf]
        %v1790 = vld [vmem:[#allocation8 + $0x1c0] sm:$0xf]
        %v1791 = vld [vmem:[#allocation8 + $0x1c4] sm:$0xf]
        %v1792 = vld [vmem:[#allocation8 + $0x1c8] sm:$0xf]
        %v1793 = vld [vmem:[#allocation8 + $0x1cc] sm:$0xf]
        %v1794 = vld [vmem:[#allocation8 + $0x1d0] sm:$0xf]
        %v1795 = vld [vmem:[#allocation8 + $0x1d4] sm:$0xf]
        %v1796 = vld [vmem:[#allocation8 + $0x1d8] sm:$0xf]
        %v1797 = vld [vmem:[#allocation8 + $0x1dc] sm:$0xf]
        %v1798 = vld [vmem:[#allocation8 + $0x1e0] sm:$0xf]
        %v1799 = vld [vmem:[#allocation8 + $0x1e4] sm:$0xf]
        %v1800 = vld [vmem:[#allocation8 + $0x1e8] sm:$0xf]
        %v1801 = vld [vmem:[#allocation8 + $0x1ec] sm:$0xf]
        %v1802 = vld [vmem:[#allocation8 + $0x1f0] sm:$0xf]
        %v1803 = vld [vmem:[#allocation8 + $0x1f4] sm:$0xf]
        %v1804 = vld [vmem:[#allocation8 + $0x1f8] sm:$0xf]
        %v1805 = vld [vmem:[#allocation8 + $0x1fc] sm:$0xf]
        %v1806 = vld [vmem:[%s4] sm:$0x1]
        %v1808 = vlaneseq
        %v1809 = vshrl.u32 %v1808, 7
        %v1810 = vsub.s32 0, %v1809
        %v1811 = vrot.slane %v1806, %v1810
        %v1941 = vunpack.c.l.b16 %v1678
        %v1942 = vunpack.c.l.b16 %v1679
        %v1943 = vunpack.c.l.b16 %v1680
        %v1944 = vunpack.c.l.b16 %v1681
        %v1945 = vunpack.c.l.b16 %v1682
        %v1946 = vunpack.c.l.b16 %v1683
        %v1947 = vunpack.c.l.b16 %v1684
        %v1948 = vunpack.c.l.b16 %v1685
        %v1949 = vunpack.c.l.b16 %v1686
        %v1950 = vunpack.c.l.b16 %v1687
        %v1951 = vunpack.c.l.b16 %v1688
        %v1952 = vunpack.c.l.b16 %v1689
        %v1953 = vunpack.c.l.b16 %v1690
        %v1954 = vunpack.c.l.b16 %v1691
        %v1955 = vunpack.c.l.b16 %v1692
        %v1956 = vunpack.c.l.b16 %v1693
        %v1957 = vunpack.c.l.b16 %v1694
        %v1958 = vunpack.c.l.b16 %v1695
        %v1959 = vunpack.c.l.b16 %v1696
        %v1960 = vunpack.c.l.b16 %v1697
        %v1961 = vunpack.c.l.b16 %v1698
        %v1962 = vunpack.c.l.b16 %v1699
        %v1963 = vunpack.c.l.b16 %v1700
        %v1964 = vunpack.c.l.b16 %v1701
        %v1965 = vunpack.c.l.b16 %v1702
        %v1966 = vunpack.c.l.b16 %v1703
        %v1967 = vunpack.c.l.b16 %v1704
        %v1968 = vunpack.c.l.b16 %v1705
        %v1969 = vunpack.c.l.b16 %v1706
        %v1970 = vunpack.c.l.b16 %v1707
        %v1971 = vunpack.c.l.b16 %v1708
        %v1972 = vunpack.c.l.b16 %v1709
        %v1973 = vunpack.c.l.b16 %v1710
        %v1974 = vunpack.c.l.b16 %v1711
        %v1975 = vunpack.c.l.b16 %v1712
        %v1976 = vunpack.c.l.b16 %v1713
        %v1977 = vunpack.c.l.b16 %v1714
        %v1978 = vunpack.c.l.b16 %v1715
        %v1979 = vunpack.c.l.b16 %v1716
        %v1980 = vunpack.c.l.b16 %v1717
        %v1981 = vunpack.c.l.b16 %v1718
        %v1982 = vunpack.c.l.b16 %v1719
        %v1983 = vunpack.c.l.b16 %v1720
        %v1984 = vunpack.c.l.b16 %v1721
        %v1985 = vunpack.c.l.b16 %v1722
        %v1986 = vunpack.c.l.b16 %v1723
        %v1987 = vunpack.c.l.b16 %v1724
        %v1988 = vunpack.c.l.b16 %v1725
        %v1989 = vunpack.c.l.b16 %v1726
        %v1990 = vunpack.c.l.b16 %v1727
        %v1991 = vunpack.c.l.b16 %v1728
        %v1992 = vunpack.c.l.b16 %v1729
        %v1993 = vunpack.c.l.b16 %v1730
        %v1994 = vunpack.c.l.b16 %v1731
        %v1995 = vunpack.c.l.b16 %v1732
        %v1996 = vunpack.c.l.b16 %v1733
        %v1997 = vunpack.c.l.b16 %v1734
        %v1998 = vunpack.c.l.b16 %v1735
        %v1999 = vunpack.c.l.b16 %v1736
        %v2000 = vunpack.c.l.b16 %v1737
        %v2001 = vunpack.c.l.b16 %v1738
        %v2002 = vunpack.c.l.b16 %v1739
        %v2003 = vunpack.c.l.b16 %v1740
        %v2004 = vunpack.c.l.b16 %v1741
        %v2005 = vunpack.c.l.b16 %v1742
        %v2006 = vunpack.c.l.b16 %v1743
        %v2007 = vunpack.c.l.b16 %v1744
        %v2008 = vunpack.c.l.b16 %v1745
        %v2009 = vunpack.c.l.b16 %v1746
        %v2010 = vunpack.c.l.b16 %v1747
        %v2011 = vunpack.c.l.b16 %v1748
        %v2012 = vunpack.c.l.b16 %v1749
        %v2013 = vunpack.c.l.b16 %v1750
        %v2014 = vunpack.c.l.b16 %v1751
        %v2015 = vunpack.c.l.b16 %v1752
        %v2016 = vunpack.c.l.b16 %v1753
        %v2017 = vunpack.c.l.b16 %v1754
        %v2018 = vunpack.c.l.b16 %v1755
        %v2019 = vunpack.c.l.b16 %v1756
        %v2020 = vunpack.c.l.b16 %v1757
        %v2021 = vunpack.c.l.b16 %v1758
        %v2022 = vunpack.c.l.b16 %v1759
        %v2023 = vunpack.c.l.b16 %v1760
        %v2024 = vunpack.c.l.b16 %v1761
        %v2025 = vunpack.c.l.b16 %v1762
        %v2026 = vunpack.c.l.b16 %v1763
        %v2027 = vunpack.c.l.b16 %v1764
        %v2028 = vunpack.c.l.b16 %v1765
        %v2029 = vunpack.c.l.b16 %v1766
        %v2030 = vunpack.c.l.b16 %v1767
        %v2031 = vunpack.c.l.b16 %v1768
        %v2032 = vunpack.c.l.b16 %v1769
        %v2033 = vunpack.c.l.b16 %v1770
        %v2034 = vunpack.c.l.b16 %v1771
        %v2035 = vunpack.c.l.b16 %v1772
        %v2036 = vunpack.c.l.b16 %v1773
        %v2037 = vunpack.c.l.b16 %v1774
        %v2038 = vunpack.c.l.b16 %v1775
        %v2039 = vunpack.c.l.b16 %v1776
        %v2040 = vunpack.c.l.b16 %v1777
        %v2041 = vunpack.c.l.b16 %v1778
        %v2042 = vunpack.c.l.b16 %v1779
        %v2043 = vunpack.c.l.b16 %v1780
        %v2044 = vunpack.c.l.b16 %v1781
        %v2045 = vunpack.c.l.b16 %v1782
        %v2046 = vunpack.c.l.b16 %v1783
        %v2047 = vunpack.c.l.b16 %v1784
        %v2048 = vunpack.c.l.b16 %v1785
        %v2049 = vunpack.c.l.b16 %v1786
        %v2050 = vunpack.c.l.b16 %v1787
        %v2051 = vunpack.c.l.b16 %v1788
        %v2052 = vunpack.c.l.b16 %v1789
        %v2053 = vunpack.c.l.b16 %v1790
        %v2054 = vunpack.c.l.b16 %v1791
        %v2055 = vunpack.c.l.b16 %v1792
        %v2056 = vunpack.c.l.b16 %v1793
        %v2057 = vunpack.c.l.b16 %v1794
        %v2058 = vunpack.c.l.b16 %v1795
        %v2059 = vunpack.c.l.b16 %v1796
        %v2060 = vunpack.c.l.b16 %v1797
        %v2061 = vunpack.c.l.b16 %v1798
        %v2062 = vunpack.c.l.b16 %v1799
        %v2063 = vunpack.c.l.b16 %v1800
        %v2064 = vunpack.c.l.b16 %v1801
        %v2065 = vunpack.c.l.b16 %v1802
        %v2066 = vunpack.c.l.b16 %v1803
        %v2067 = vunpack.c.l.b16 %v1804
        %v2068 = vunpack.c.l.b16 %v1805
        %v2069 = vpack.c.b16 %v1942, %v1941
        %v2070 = vpack.c.b16 %v1944, %v1943
        %v2071 = vpack.c.b16 %v1946, %v1945
        %v2072 = vpack.c.b16 %v1948, %v1947
        %v2073 = vpack.c.b16 %v1950, %v1949
        %v2074 = vpack.c.b16 %v1952, %v1951
        %v2075 = vpack.c.b16 %v1954, %v1953
        %v2076 = vpack.c.b16 %v1956, %v1955
        %v2077 = vpack.c.b16 %v1958, %v1957
        %v2078 = vpack.c.b16 %v1960, %v1959
        %v2079 = vpack.c.b16 %v1962, %v1961
        %v2080 = vpack.c.b16 %v1964, %v1963
        %v2081 = vpack.c.b16 %v1966, %v1965
        %v2082 = vpack.c.b16 %v1968, %v1967
        %v2083 = vpack.c.b16 %v1970, %v1969
        %v2084 = vpack.c.b16 %v1972, %v1971
        %v2085 = vpack.c.b16 %v1974, %v1973
        %v2086 = vpack.c.b16 %v1976, %v1975
        %v2087 = vpack.c.b16 %v1978, %v1977
        %v2088 = vpack.c.b16 %v1980, %v1979
        %v2089 = vpack.c.b16 %v1982, %v1981
        %v2090 = vpack.c.b16 %v1984, %v1983
        %v2091 = vpack.c.b16 %v1986, %v1985
        %v2092 = vpack.c.b16 %v1988, %v1987
        %v2093 = vpack.c.b16 %v1990, %v1989
        %v2094 = vpack.c.b16 %v1992, %v1991
        %v2095 = vpack.c.b16 %v1994, %v1993
        %v2096 = vpack.c.b16 %v1996, %v1995
        %v2097 = vpack.c.b16 %v1998, %v1997
        %v2098 = vpack.c.b16 %v2000, %v1999
        %v2099 = vpack.c.b16 %v2002, %v2001
        %v2100 = vpack.c.b16 %v2004, %v2003
        %v2101 = vpack.c.b16 %v2006, %v2005
        %v2102 = vpack.c.b16 %v2008, %v2007
        %v2103 = vpack.c.b16 %v2010, %v2009
        %v2104 = vpack.c.b16 %v2012, %v2011
        %v2105 = vpack.c.b16 %v2014, %v2013
        %v2106 = vpack.c.b16 %v2016, %v2015
        %v2107 = vpack.c.b16 %v2018, %v2017
        %v2108 = vpack.c.b16 %v2020, %v2019
        %v2109 = vpack.c.b16 %v2022, %v2021
        %v2110 = vpack.c.b16 %v2024, %v2023
        %v2111 = vpack.c.b16 %v2026, %v2025
        %v2112 = vpack.c.b16 %v2028, %v2027
        %v2113 = vpack.c.b16 %v2030, %v2029
        %v2114 = vpack.c.b16 %v2032, %v2031
        %v2115 = vpack.c.b16 %v2034, %v2033
        %v2116 = vpack.c.b16 %v2036, %v2035
        %v2117 = vpack.c.b16 %v2038, %v2037
        %v2118 = vpack.c.b16 %v2040, %v2039
        %v2119 = vpack.c.b16 %v2042, %v2041
        %v2120 = vpack.c.b16 %v2044, %v2043
        %v2121 = vpack.c.b16 %v2046, %v2045
        %v2122 = vpack.c.b16 %v2048, %v2047
        %v2123 = vpack.c.b16 %v2050, %v2049
        %v2124 = vpack.c.b16 %v2052, %v2051
        %v2125 = vpack.c.b16 %v2054, %v2053
        %v2126 = vpack.c.b16 %v2056, %v2055
        %v2127 = vpack.c.b16 %v2058, %v2057
        %v2128 = vpack.c.b16 %v2060, %v2059
        %v2129 = vpack.c.b16 %v2062, %v2061
        %v2130 = vpack.c.b16 %v2064, %v2063
        %v2131 = vpack.c.b16 %v2066, %v2065
        %v2132 = vpack.c.b16 %v2068, %v2067
        %2197 = vmatprep.subr.bf16.mxu0 0
        %2198 = vmatpush1.bf16.msra.mxu0 %v2076
        %2199 = vmatprep.subr.bf16.mxu0 0
        %2200 = vmatpush1.bf16.msra.mxu0 %v2075
        %2201 = vmatprep.subr.bf16.mxu0 0
        %2202 = vmatpush1.bf16.msra.mxu0 %v2074
        %2203 = vmatprep.subr.bf16.mxu0 0
        %2204 = vmatpush1.bf16.msra.mxu0 %v2073
        %2205 = vmatprep.subr.bf16.mxu0 0
        %2206 = vmatpush1.bf16.msra.mxu0 %v2072
        %2207 = vmatprep.subr.bf16.mxu0 0
        %2208 = vmatpush1.bf16.msra.mxu0 %v2071
        %2209 = vmatprep.subr.bf16.mxu0 0
        %2210 = vmatpush1.bf16.msra.mxu0 %v2070
        %2211 = vmatprep.subr.bf16.mxu0 0
        %2212 = vmatpush1.bf16.msra.mxu0 %v2069
        %2213 = vmatprep.subr.bf16.mxu0 0
        %2214 = vmatpush2.bf16.msra.mxu0 %v2084
        %2215 = vmatprep.subr.bf16.mxu0 0
        %2216 = vmatpush2.bf16.msra.mxu0 %v2083
        %2217 = vmatprep.subr.bf16.mxu0 0
        %2218 = vmatpush2.bf16.msra.mxu0 %v2082
        %2219 = vmatprep.subr.bf16.mxu0 0
        %2220 = vmatpush2.bf16.msra.mxu0 %v2081
        %2221 = vmatprep.subr.bf16.mxu0 0
        %2222 = vmatpush2.bf16.msra.mxu0 %v2080
        %2223 = vmatprep.subr.bf16.mxu0 0
        %2224 = vmatpush2.bf16.msra.mxu0 %v2079
        %2225 = vmatprep.subr.bf16.mxu0 0
        %2226 = vmatpush2.bf16.msra.mxu0 %v2078
        %2227 = vmatprep.subr.bf16.mxu0 0
        %2228 = vmatpush2.bf16.msra.mxu0 %v2077
        %2229 = vmatprep.mubr.bf16.mxu0 %v1615
        %2230 = vmatmul.mubr.bf16.gmra.mxu0 %v1614
        %v2231 = vpop.f32.mrf.mxu0
        %v2232 = vadd.f32 %v1811, %v2231
        %v2233 = vpop.f32.mrf.mxu0
        %v2234 = vpop.f32.mrf.mxu0
        %v2235 = vadd.f32 %v1811, %v2234
        %v2236 = vpop.f32.mrf.mxu0
        %2237 = vmatprep.mubr.bf16.mxu0 %v1623
        %2238 = vmatmul.mubr.bf16.gmra.mxu0 %v1622
        %v2239 = vpop.f32.mrf.mxu0
        %v2240 = vadd.f32 %v1811, %v2239
        %v2241 = vpop.f32.mrf.mxu0
        %v2242 = vpop.f32.mrf.mxu0
        %v2243 = vadd.f32 %v1811, %v2242
        %v2244 = vpop.f32.mrf.mxu0
        %2245 = vmatprep.mubr.bf16.mxu0 %v1631
        %2246 = vmatmul.mubr.bf16.gmra.mxu0 %v1630
        %v2247 = vpop.f32.mrf.mxu0
        %v2248 = vadd.f32 %v1811, %v2247
        %v2249 = vpop.f32.mrf.mxu0
        %v2250 = vpop.f32.mrf.mxu0
        %v2251 = vadd.f32 %v1811, %v2250
        %v2252 = vpop.f32.mrf.mxu0
        %2253 = vmatprep.mubr.bf16.mxu0 %v1639
        %2254 = vmatmul.mubr.bf16.gmra.mxu0 %v1638
        %v2255 = vpop.f32.mrf.mxu0
        %v2256 = vadd.f32 %v1811, %v2255
        %v2257 = vpop.f32.mrf.mxu0
        %v2258 = vpop.f32.mrf.mxu0
        %v2259 = vadd.f32 %v1811, %v2258
        %v2260 = vpop.f32.mrf.mxu0
        %2261 = vmatprep.mubr.bf16.mxu0 %v1647
        %2262 = vmatmul.mubr.bf16.gmra.mxu0 %v1646
        %v2263 = vpop.f32.mrf.mxu0
        %v2264 = vadd.f32 %v1811, %v2263
        %v2265 = vpop.f32.mrf.mxu0
        %v2266 = vpop.f32.mrf.mxu0
        %v2267 = vadd.f32 %v1811, %v2266
        %v2268 = vpop.f32.mrf.mxu0
        %2269 = vmatprep.mubr.bf16.mxu0 %v1655
        %2270 = vmatmul.mubr.bf16.gmra.mxu0 %v1654
        %v2271 = vpop.f32.mrf.mxu0
        %v2272 = vadd.f32 %v1811, %v2271
        %v2273 = vpop.f32.mrf.mxu0
        %v2274 = vpop.f32.mrf.mxu0
        %v2275 = vadd.f32 %v1811, %v2274
        %v2276 = vpop.f32.mrf.mxu0
        %2277 = vmatprep.mubr.bf16.mxu0 %v1663
        %2278 = vmatmul.mubr.bf16.gmra.mxu0 %v1662
        %v2279 = vpop.f32.mrf.mxu0
        %v2280 = vadd.f32 %v1811, %v2279
        %v2281 = vpop.f32.mrf.mxu0
        %v2282 = vpop.f32.mrf.mxu0
        %v2283 = vadd.f32 %v1811, %v2282
        %v2284 = vpop.f32.mrf.mxu0
        %2285 = vmatprep.mubr.bf16.mxu0 %v1671
        %2286 = vmatmul.mubr.bf16.gmra.mxu0 %v1670
        %v2287 = vpop.f32.mrf.mxu0
        %v2288 = vadd.f32 %v1811, %v2287
        %v2289 = vpop.f32.mrf.mxu0
        %v2290 = vpop.f32.mrf.mxu0
        %v2291 = vadd.f32 %v1811, %v2290
        %v2292 = vpop.f32.mrf.mxu0
        %2293 = vdwg.mxu0
        %2294 = vmatprep.subr.bf16.mxu0 0
        %2295 = vmatpush1.bf16.msra.mxu0 %v2092
        %2296 = vmatprep.subr.bf16.mxu0 0
        %2297 = vmatpush1.bf16.msra.mxu0 %v2091
        %2298 = vmatprep.subr.bf16.mxu0 0
        %2299 = vmatpush1.bf16.msra.mxu0 %v2090
        %2300 = vmatprep.subr.bf16.mxu0 0
        %2301 = vmatpush1.bf16.msra.mxu0 %v2089
        %2302 = vmatprep.subr.bf16.mxu0 0
        %2303 = vmatpush1.bf16.msra.mxu0 %v2088
        %2304 = vmatprep.subr.bf16.mxu0 0
        %2305 = vmatpush1.bf16.msra.mxu0 %v2087
        %2306 = vmatprep.subr.bf16.mxu0 0
        %2307 = vmatpush1.bf16.msra.mxu0 %v2086
        %2308 = vmatprep.subr.bf16.mxu0 0
        %2309 = vmatpush1.bf16.msra.mxu0 %v2085
        %2310 = vmatprep.subr.bf16.mxu0 0
        %2311 = vmatpush2.bf16.msra.mxu0 %v2100
        %2312 = vmatprep.subr.bf16.mxu0 0
        %2313 = vmatpush2.bf16.msra.mxu0 %v2099
        %2314 = vmatprep.subr.bf16.mxu0 0
        %2315 = vmatpush2.bf16.msra.mxu0 %v2098
        %2316 = vmatprep.subr.bf16.mxu0 0
        %2317 = vmatpush2.bf16.msra.mxu0 %v2097
        %2318 = vmatprep.subr.bf16.mxu0 0
        %2319 = vmatpush2.bf16.msra.mxu0 %v2096
        %2320 = vmatprep.subr.bf16.mxu0 0
        %2321 = vmatpush2.bf16.msra.mxu0 %v2095
        %2322 = vmatprep.subr.bf16.mxu0 0
        %2323 = vmatpush2.bf16.msra.mxu0 %v2094
        %2324 = vmatprep.subr.bf16.mxu0 0
        %2325 = vmatpush2.bf16.msra.mxu0 %v2093
        %2326 = vmatprep.mubr.bf16.mxu0 %v1617
        %2327 = vmatmul.mubr.bf16.gmra.mxu0 %v1616
        %v2328 = vpop.f32.mrf.mxu0
        %v2329 = vadd.f32 %v2232, %v2328
        %v2330 = vpop.f32.mrf.mxu0
        %v2331 = vpop.f32.mrf.mxu0
        %v2332 = vadd.f32 %v2235, %v2331
        %v2333 = vpop.f32.mrf.mxu0
        %2334 = vmatprep.mubr.bf16.mxu0 %v1625
        %2335 = vmatmul.mubr.bf16.gmra.mxu0 %v1624
        %v2336 = vpop.f32.mrf.mxu0
        %v2337 = vadd.f32 %v2240, %v2336
        %v2338 = vpop.f32.mrf.mxu0
        %v2339 = vpop.f32.mrf.mxu0
        %v2340 = vadd.f32 %v2243, %v2339
        %v2341 = vpop.f32.mrf.mxu0
        %2342 = vmatprep.mubr.bf16.mxu0 %v1633
        %2343 = vmatmul.mubr.bf16.gmra.mxu0 %v1632
        %v2344 = vpop.f32.mrf.mxu0
        %v2345 = vadd.f32 %v2248, %v2344
        %v2346 = vpop.f32.mrf.mxu0
        %v2347 = vpop.f32.mrf.mxu0
        %v2348 = vadd.f32 %v2251, %v2347
        %v2349 = vpop.f32.mrf.mxu0
        %2350 = vmatprep.mubr.bf16.mxu0 %v1641
        %2351 = vmatmul.mubr.bf16.gmra.mxu0 %v1640
        %v2352 = vpop.f32.mrf.mxu0
        %v2353 = vadd.f32 %v2256, %v2352
        %v2354 = vpop.f32.mrf.mxu0
        %v2355 = vpop.f32.mrf.mxu0
        %v2356 = vadd.f32 %v2259, %v2355
        %v2357 = vpop.f32.mrf.mxu0
        %2358 = vmatprep.mubr.bf16.mxu0 %v1649
        %2359 = vmatmul.mubr.bf16.gmra.mxu0 %v1648
        %v2360 = vpop.f32.mrf.mxu0
        %v2361 = vadd.f32 %v2264, %v2360
        %v2362 = vpop.f32.mrf.mxu0
        %v2363 = vpop.f32.mrf.mxu0
        %v2364 = vadd.f32 %v2267, %v2363
        %v2365 = vpop.f32.mrf.mxu0
        %2366 = vmatprep.mubr.bf16.mxu0 %v1657
        %2367 = vmatmul.mubr.bf16.gmra.mxu0 %v1656
        %v2368 = vpop.f32.mrf.mxu0
        %v2369 = vadd.f32 %v2272, %v2368
        %v2370 = vpop.f32.mrf.mxu0
        %v2371 = vpop.f32.mrf.mxu0
        %v2372 = vadd.f32 %v2275, %v2371
        %v2373 = vpop.f32.mrf.mxu0
        %2374 = vmatprep.mubr.bf16.mxu0 %v1665
        %2375 = vmatmul.mubr.bf16.gmra.mxu0 %v1664
        %v2376 = vpop.f32.mrf.mxu0
        %v2377 = vadd.f32 %v2280, %v2376
        %v2378 = vpop.f32.mrf.mxu0
        %v2379 = vpop.f32.mrf.mxu0
        %v2380 = vadd.f32 %v2283, %v2379
        %v2381 = vpop.f32.mrf.mxu0
        %2382 = vmatprep.mubr.bf16.mxu0 %v1673
        %2383 = vmatmul.mubr.bf16.gmra.mxu0 %v1672
        %v2384 = vpop.f32.mrf.mxu0
        %v2385 = vadd.f32 %v2288, %v2384
        %v2386 = vpop.f32.mrf.mxu0
        %v2387 = vpop.f32.mrf.mxu0
        %v2388 = vadd.f32 %v2291, %v2387
        %v2389 = vpop.f32.mrf.mxu0
        %2390 = vdwg.mxu0
        %2391 = vmatprep.subr.bf16.mxu0 0
        %2392 = vmatpush1.bf16.msra.mxu0 %v2108
        %2393 = vmatprep.subr.bf16.mxu0 0
        %2394 = vmatpush1.bf16.msra.mxu0 %v2107
        %2395 = vmatprep.subr.bf16.mxu0 0
        %2396 = vmatpush1.bf16.msra.mxu0 %v2106
        %2397 = vmatprep.subr.bf16.mxu0 0
        %2398 = vmatpush1.bf16.msra.mxu0 %v2105
        %2399 = vmatprep.subr.bf16.mxu0 0
        %2400 = vmatpush1.bf16.msra.mxu0 %v2104
        %2401 = vmatprep.subr.bf16.mxu0 0
        %2402 = vmatpush1.bf16.msra.mxu0 %v2103
        %2403 = vmatprep.subr.bf16.mxu0 0
        %2404 = vmatpush1.bf16.msra.mxu0 %v2102
        %2405 = vmatprep.subr.bf16.mxu0 0
        %2406 = vmatpush1.bf16.msra.mxu0 %v2101
        %2407 = vmatprep.subr.bf16.mxu0 0
        %2408 = vmatpush2.bf16.msra.mxu0 %v2116
        %2409 = vmatprep.subr.bf16.mxu0 0
        %2410 = vmatpush2.bf16.msra.mxu0 %v2115
        %2411 = vmatprep.subr.bf16.mxu0 0
        %2412 = vmatpush2.bf16.msra.mxu0 %v2114
        %2413 = vmatprep.subr.bf16.mxu0 0
        %2414 = vmatpush2.bf16.msra.mxu0 %v2113
        %2415 = vmatprep.subr.bf16.mxu0 0
        %2416 = vmatpush2.bf16.msra.mxu0 %v2112
        %2417 = vmatprep.subr.bf16.mxu0 0
        %2418 = vmatpush2.bf16.msra.mxu0 %v2111
        %2419 = vmatprep.subr.bf16.mxu0 0
        %2420 = vmatpush2.bf16.msra.mxu0 %v2110
        %2421 = vmatprep.subr.bf16.mxu0 0
        %2422 = vmatpush2.bf16.msra.mxu0 %v2109
        %2423 = vmatprep.mubr.bf16.mxu0 %v1619
        %2424 = vmatmul.mubr.bf16.gmra.mxu0 %v1618
        %v2425 = vpop.f32.mrf.mxu0
        %v2426 = vadd.f32 %v2329, %v2425
        %v2427 = vpop.f32.mrf.mxu0
        %v2428 = vpop.f32.mrf.mxu0
        %v2429 = vadd.f32 %v2332, %v2428
        %v2430 = vpop.f32.mrf.mxu0
        %2431 = vmatprep.mubr.bf16.mxu0 %v1627
        %2432 = vmatmul.mubr.bf16.gmra.mxu0 %v1626
        %v2433 = vpop.f32.mrf.mxu0
        %v2434 = vadd.f32 %v2337, %v2433
        %v2435 = vpop.f32.mrf.mxu0
        %v2436 = vpop.f32.mrf.mxu0
        %v2437 = vadd.f32 %v2340, %v2436
        %v2438 = vpop.f32.mrf.mxu0
        %2439 = vmatprep.mubr.bf16.mxu0 %v1635
        %2440 = vmatmul.mubr.bf16.gmra.mxu0 %v1634
        %v2441 = vpop.f32.mrf.mxu0
        %v2442 = vadd.f32 %v2345, %v2441
        %v2443 = vpop.f32.mrf.mxu0
        %v2444 = vpop.f32.mrf.mxu0
        %v2445 = vadd.f32 %v2348, %v2444
        %v2446 = vpop.f32.mrf.mxu0
        %2447 = vmatprep.mubr.bf16.mxu0 %v1643
        %2448 = vmatmul.mubr.bf16.gmra.mxu0 %v1642
        %v2449 = vpop.f32.mrf.mxu0
        %v2450 = vadd.f32 %v2353, %v2449
        %v2451 = vpop.f32.mrf.mxu0
        %v2452 = vpop.f32.mrf.mxu0
        %v2453 = vadd.f32 %v2356, %v2452
        %v2454 = vpop.f32.mrf.mxu0
        %2455 = vmatprep.mubr.bf16.mxu0 %v1651
        %2456 = vmatmul.mubr.bf16.gmra.mxu0 %v1650
        %v2457 = vpop.f32.mrf.mxu0
        %v2458 = vadd.f32 %v2361, %v2457
        %v2459 = vpop.f32.mrf.mxu0
        %v2460 = vpop.f32.mrf.mxu0
        %v2461 = vadd.f32 %v2364, %v2460
        %v2462 = vpop.f32.mrf.mxu0
        %2463 = vmatprep.mubr.bf16.mxu0 %v1659
        %2464 = vmatmul.mubr.bf16.gmra.mxu0 %v1658
        %v2465 = vpop.f32.mrf.mxu0
        %v2466 = vadd.f32 %v2369, %v2465
        %v2467 = vpop.f32.mrf.mxu0
        %v2468 = vpop.f32.mrf.mxu0
        %v2469 = vadd.f32 %v2372, %v2468
        %v2470 = vpop.f32.mrf.mxu0
        %2471 = vmatprep.mubr.bf16.mxu0 %v1667
        %2472 = vmatmul.mubr.bf16.gmra.mxu0 %v1666
        %v2473 = vpop.f32.mrf.mxu0
        %v2474 = vadd.f32 %v2377, %v2473
        %v2475 = vpop.f32.mrf.mxu0
        %v2476 = vpop.f32.mrf.mxu0
        %v2477 = vadd.f32 %v2380, %v2476
        %v2478 = vpop.f32.mrf.mxu0
        %2479 = vmatprep.mubr.bf16.mxu0 %v1675
        %2480 = vmatmul.mubr.bf16.gmra.mxu0 %v1674
        %v2481 = vpop.f32.mrf.mxu0
        %v2482 = vadd.f32 %v2385, %v2481
        %v2483 = vpop.f32.mrf.mxu0
        %v2484 = vpop.f32.mrf.mxu0
        %v2485 = vadd.f32 %v2388, %v2484
        %v2486 = vpop.f32.mrf.mxu0
        %2487 = vdwg.mxu0
        %2488 = vmatprep.subr.bf16.mxu0 0
        %2489 = vmatpush1.bf16.msra.mxu0 %v2124
        %2490 = vmatprep.subr.bf16.mxu0 0
        %2491 = vmatpush1.bf16.msra.mxu0 %v2123
        %2492 = vmatprep.subr.bf16.mxu0 0
        %2493 = vmatpush1.bf16.msra.mxu0 %v2122
        %2494 = vmatprep.subr.bf16.mxu0 0
        %2495 = vmatpush1.bf16.msra.mxu0 %v2121
        %2496 = vmatprep.subr.bf16.mxu0 0
        %2497 = vmatpush1.bf16.msra.mxu0 %v2120
        %2498 = vmatprep.subr.bf16.mxu0 0
        %2499 = vmatpush1.bf16.msra.mxu0 %v2119
        %2500 = vmatprep.subr.bf16.mxu0 0
        %2501 = vmatpush1.bf16.msra.mxu0 %v2118
        %2502 = vmatprep.subr.bf16.mxu0 0
        %2503 = vmatpush1.bf16.msra.mxu0 %v2117
        %2504 = vmatprep.subr.bf16.mxu0 0
        %2505 = vmatpush2.bf16.msra.mxu0 %v2132
        %2506 = vmatprep.subr.bf16.mxu0 0
        %2507 = vmatpush2.bf16.msra.mxu0 %v2131
        %2508 = vmatprep.subr.bf16.mxu0 0
        %2509 = vmatpush2.bf16.msra.mxu0 %v2130
        %2510 = vmatprep.subr.bf16.mxu0 0
        %2511 = vmatpush2.bf16.msra.mxu0 %v2129
        %2512 = vmatprep.subr.bf16.mxu0 0
        %2513 = vmatpush2.bf16.msra.mxu0 %v2128
        %2514 = vmatprep.subr.bf16.mxu0 0
        %2515 = vmatpush2.bf16.msra.mxu0 %v2127
        %2516 = vmatprep.subr.bf16.mxu0 0
        %2517 = vmatpush2.bf16.msra.mxu0 %v2126
        %2518 = vmatprep.subr.bf16.mxu0 0
        %2519 = vmatpush2.bf16.msra.mxu0 %v2125
        %2520 = vmatprep.mubr.bf16.mxu0 %v1621
        %2521 = vmatmul.mubr.bf16.gmra.mxu0 %v1620
        %v2522 = vpop.f32.mrf.mxu0
        %v2523 = vadd.f32 %v2426, %v2522
        %v2524 = vpop.f32.mrf.mxu0
        %v2525 = vpop.f32.mrf.mxu0
        %v2526 = vadd.f32 %v2429, %v2525
        %v2527 = vpop.f32.mrf.mxu0
        %2528 = vmatprep.mubr.bf16.mxu0 %v1629
        %2529 = vmatmul.mubr.bf16.gmra.mxu0 %v1628
        %v2530 = vpop.f32.mrf.mxu0
        %v2531 = vadd.f32 %v2434, %v2530
        %v2532 = vpop.f32.mrf.mxu0
        %v2533 = vpop.f32.mrf.mxu0
        %v2534 = vadd.f32 %v2437, %v2533
        %v2535 = vpop.f32.mrf.mxu0
        %2536 = vmatprep.mubr.bf16.mxu0 %v1637
        %2537 = vmatmul.mubr.bf16.gmra.mxu0 %v1636
        %v2538 = vpop.f32.mrf.mxu0
        %v2539 = vadd.f32 %v2442, %v2538
        %v2540 = vpop.f32.mrf.mxu0
        %v2541 = vpop.f32.mrf.mxu0
        %v2542 = vadd.f32 %v2445, %v2541
        %v2543 = vpop.f32.mrf.mxu0
        %2544 = vmatprep.mubr.bf16.mxu0 %v1645
        %2545 = vmatmul.mubr.bf16.gmra.mxu0 %v1644
        %v2546 = vpop.f32.mrf.mxu0
        %v2547 = vadd.f32 %v2450, %v2546
        %v2548 = vpop.f32.mrf.mxu0
        %v2549 = vpop.f32.mrf.mxu0
        %v2550 = vadd.f32 %v2453, %v2549
        %v2551 = vpop.f32.mrf.mxu0
        %2552 = vmatprep.mubr.bf16.mxu0 %v1653
        %2553 = vmatmul.mubr.bf16.gmra.mxu0 %v1652
        %v2554 = vpop.f32.mrf.mxu0
        %v2555 = vadd.f32 %v2458, %v2554
        %v2556 = vpop.f32.mrf.mxu0
        %v2557 = vpop.f32.mrf.mxu0
        %v2558 = vadd.f32 %v2461, %v2557
        %v2559 = vpop.f32.mrf.mxu0
        %2560 = vmatprep.mubr.bf16.mxu0 %v1661
        %2561 = vmatmul.mubr.bf16.gmra.mxu0 %v1660
        %v2562 = vpop.f32.mrf.mxu0
        %v2563 = vadd.f32 %v2466, %v2562
        %v2564 = vpop.f32.mrf.mxu0
        %v2565 = vpop.f32.mrf.mxu0
        %v2566 = vadd.f32 %v2469, %v2565
        %v2567 = vpop.f32.mrf.mxu0
        %2568 = vmatprep.mubr.bf16.mxu0 %v1669
        %2569 = vmatmul.mubr.bf16.gmra.mxu0 %v1668
        %v2570 = vpop.f32.mrf.mxu0
        %v2571 = vadd.f32 %v2474, %v2570
        %v2572 = vpop.f32.mrf.mxu0
        %v2573 = vpop.f32.mrf.mxu0
        %v2574 = vadd.f32 %v2477, %v2573
        %v2575 = vpop.f32.mrf.mxu0
        %2576 = vmatprep.mubr.bf16.mxu0 %v1677
        %2577 = vmatmul.mubr.bf16.gmra.mxu0 %v1676
        %v2578 = vpop.f32.mrf.mxu0
        %v2579 = vadd.f32 %v2482, %v2578
        %v2580 = vpop.f32.mrf.mxu0
        %v2581 = vpop.f32.mrf.mxu0
        %v2582 = vadd.f32 %v2485, %v2581
        %v2583 = vpop.f32.mrf.mxu0
        %2584 = vdwg.mxu0
        %2585 = vst [vmem:[%s284] sm:$0xff] %v2523
        %2586 = vst [vmem:[%s284 + $0x8] sm:$0xff] %v2526
        %2587 = vst [vmem:[%s284 + $0x10] sm:$0xff] %v2531
        %2588 = vst [vmem:[%s284 + $0x18] sm:$0xff] %v2534
        %2589 = vst [vmem:[%s284 + $0x20] sm:$0xff] %v2539
        %2590 = vst [vmem:[%s284 + $0x28] sm:$0xff] %v2542
        %2591 = vst [vmem:[%s284 + $0x30] sm:$0xff] %v2547
        %2592 = vst [vmem:[%s284 + $0x38] sm:$0xff] %v2550
        %2593 = vst [vmem:[%s284 + $0x40] sm:$0xff] %v2555
        %2594 = vst [vmem:[%s284 + $0x48] sm:$0xff] %v2558
        %2595 = vst [vmem:[%s284 + $0x50] sm:$0xff] %v2563
        %2596 = vst [vmem:[%s284 + $0x58] sm:$0xff] %v2566
        %2597 = vst [vmem:[%s284 + $0x60] sm:$0xff] %v2571
        %2598 = vst [vmem:[%s284 + $0x68] sm:$0xff] %v2574
        %2599 = vst [vmem:[%s284 + $0x70] sm:$0xff] %v2579
        %2600 = vst [vmem:[%s284 + $0x78] sm:$0xff] %v2582
        %s2601 = sand.u32 %s142, 1
        %s2602 = scalar_lea.sflag [#allocation4], %s2601
        %s2603 = sand.u32 %s142, 1
        %s2604 = smul.addr %s2603, 128
        %s2605 = scalar_lea.vmem [#allocation10], %s2604
        // Predicated region
        $region57: #{tpu_custom_call.1} parent=39 // pred_check
          %p2606 = pneg %p152
        $region58: #{tpu_custom_call.1} parent=39 // pred_check_branch
          %2608 = sbr.rel (%p2606) target = $region60
        $region59: #{tpu_custom_call.1} parent=39 // pred_region
          %s2609 = smul.u32 16, %s24
          %s2611 = ssub.s32 2048, 2048
          %2612 = vsyncadd %s2602, %s2611
          %s2613 = smul.addr %s2609, 128
          %s2614 = scalar_lea.hbm %s5, %s2613
          %s2615 = sshll.u32 %s2605, 4
          %s2616 = int_to_ptr.vmem [resolvable:$true] %s2615
          %2621 = dma.vmem_to_hbm [thread:$0]  %s2616, 2048, %s2614, %s2602, 128, 128, 8
        $region60: #{tpu_custom_call.1} parent=39 // pred_fallthru
          _
      $region40: #{tpu_custom_call.1} parent=5 // pred_fallthru
        _
      %p2622 = scmp.le.s32.totalorder 2, %s19
      // Predicated region
      $region61: #{tpu_custom_call.1} parent=5 // pred_check
        %p2623 = pneg %p2622
      $region62: #{tpu_custom_call.1} parent=5 // pred_check_branch
        %2625 = sbr.rel (%p2623) target = $region64
      $region63: #{tpu_custom_call.1} parent=5 // pred_region
        %s2626 = ssub.s32 %s19, 2
        // Predicated region
        $region65: #{tpu_custom_call.1} parent=63 // pred_check
          %p2627 = pneg %p158
        $region66: #{tpu_custom_call.1} parent=63 // pred_check_branch
          %2629 = sbr.rel (%p2627) target = $region68
        $region67: #{tpu_custom_call.1} parent=63 // pred_region
          %s2630 = sand.u32 %s143, 1
          %s2631 = scalar_lea.sflag [#allocation4], %s2630
          %s2632 = sand.u32 %s143, 1
          %s2633 = smul.addr %s2632, 128
          %s2634 = scalar_lea.vmem [#allocation10], %s2633
          %2635 = dma.done %s2631, 2048
        $region68: #{tpu_custom_call.1} parent=63 // pred_fallthru
          _
      $region64: #{tpu_custom_call.1} parent=5 // pred_fallthru
        _
    $region6: #{tpu_custom_call.1} parent=1 // loop_footer
      %s23 = sadd.s32 1, %s19
    $region7: #{tpu_custom_call.1} parent=1 // loop_footer_branch
      %18 = sbr.rel target = $region3
    $region8: #{tpu_custom_call.1} parent=1 // loop_exit
      _
    %2636 = vsyncpa [#allocation3], 1
    %s2637 = scalar_lea.sflag [#allocation3], 1
    %2638 = vsyncpa %s2637, 1
    %2639 = vsyncpa [#allocation6], 1
    %2640 = vsyncpa [#allocation9], 1
    %2641 = vsyncpa [#allocation4], 1
    %s2642 = scalar_lea.sflag [#allocation4], 1
    %2643 = vsyncpa %s2642, 1

</llo_original>
